<compile_context>
chip_gen: v7x
topology: tpu7x:2x2x1
jax: 0.10.0
libtpu: 0.0.40
codegen_flags: <defaults>
</compile_context>

<pallas_src>
import math
from functools import partial

import jax
import jax.numpy as jnp
from jax import lax
from jax.experimental import pallas as pl
from jax.experimental.pallas import tpu as pltpu


def _round_up(x, m):
    return ((x + m - 1) // m) * m


def _pick_tile(dim, target, align):
    """Largest tile <= target that is a multiple of `align` and divides `dim`;
    otherwise the full dim (always legal for Pallas)."""
    if dim <= target:
        return dim
    t = (target // align) * align
    while t >= align:
        if dim % t == 0:
            return t
        t -= align
    return dim


# ---------------------------------------------------------------------------
# Fused (LayerNorm?) -> matmul -> +bias -> (GELU?) -> (+residual?) kernel.
#   grid = (M//tm, N//tn, K//tk); f32 accumulator scratch; K ("arbitrary") is
#   the reduction axis.  When LN is fused, tk == K and the normalized row tile
#   is cached once (j == 0) in a bf16 VMEM scratch and reused for all N-tiles.
# Ref order: x, w, b, [gamma, beta], [residual], out, acc_scratch, [ln_scratch]
# ---------------------------------------------------------------------------
def _fused_matmul_kernel(*refs, ln, eps, activation, has_res):
    it = iter(refs)
    x_ref = next(it)
    w_ref = next(it)
    b_ref = next(it)
    g_ref = next(it) if ln else None
    bt_ref = next(it) if ln else None
    r_ref = next(it) if has_res else None
    o_ref = next(it)
    acc_ref = next(it)
    ln_ref = next(it) if ln else None

    @pl.when(pl.program_id(2) == 0)
    def _init():
        acc_ref[...] = jnp.zeros_like(acc_ref)

    if ln:
        # LN over the full K row (tk == K enforced by the wrapper); compute it
        # once per row tile (first j) and reuse for the remaining N-tiles.
        @pl.when(pl.program_id(1) == 0)
        def _ln():
            x = x_ref[...].astype(jnp.float32)
            mean = jnp.mean(x, axis=-1, keepdims=True)
            var = jnp.mean(jnp.square(x - mean), axis=-1, keepdims=True)
            xn = (x - mean) * lax.rsqrt(var + eps)
            ln_ref[...] = (xn * g_ref[...] + bt_ref[...]).astype(jnp.bfloat16)

        lhs = ln_ref[...]
    else:
        lhs = x_ref[...].astype(jnp.bfloat16)

    acc_ref[...] += jnp.dot(lhs, w_ref[...], preferred_element_type=jnp.float32)

    @pl.when(pl.program_id(2) == pl.num_programs(2) - 1)
    def _finalize():
        y = acc_ref[...] + b_ref[...]
        if activation == "gelu":
            # exact (erf) GELU, matching torch.nn.functional.gelu / HF ViT default
            y = 0.5 * y * (1.0 + lax.erf(y * 0.7071067811865476))
        if has_res:
            y = y + r_ref[...].astype(jnp.float32)
        o_ref[...] = y.astype(o_ref.dtype)


def fused_matmul(x, w, b, *, gamma=None, beta=None, residual=None,
                 activation=None, eps=1e-12, out_dtype=jnp.float32,
                 tm=256, tn=768, tk=1024):
    M, K = x.shape
    N = w.shape[1]
    ln = gamma is not None
    has_res = residual is not None

    tm = _pick_tile(M, tm, 8)
    tn = _pick_tile(N, tn, 128)
    tk = K if ln else _pick_tile(K, tk, 128)   # LN prologue needs the full row
    grid = (M // tm, N // tn, K // tk)

    in_specs = [
        pl.BlockSpec((tm, tk), lambda i, j, k: (i, k)),
        pl.BlockSpec((tk, tn), lambda i, j, k: (k, j)),
        pl.BlockSpec((1, tn), lambda i, j, k: (0, j)),
    ]
    args = [x, w.astype(jnp.bfloat16), b.reshape(1, N).astype(jnp.float32)]
    if ln:
        ln_spec = pl.BlockSpec((1, tk), lambda i, j, k: (0, k))
        in_specs += [ln_spec, ln_spec]
        args += [gamma.reshape(1, K).astype(jnp.float32),
                 beta.reshape(1, K).astype(jnp.float32)]
    if has_res:
        in_specs.append(pl.BlockSpec((tm, tn), lambda i, j, k: (i, j)))
        args.append(residual)

    scratch = [pltpu.VMEM((tm, tn), jnp.float32)]
    if ln:
        scratch.append(pltpu.VMEM((tm, tk), jnp.bfloat16))

    # The LN cache creates a dependency across the j axis -> keep j on one core.
    sem = (("parallel", "arbitrary", "arbitrary") if ln
           else ("parallel", "parallel", "arbitrary"))

    cost = pl.CostEstimate(
        flops=2 * M * N * K,
        transcendentals=M * N if activation == "gelu" else 0,
        bytes_accessed=(M * K * x.dtype.itemsize * (N // tn)
                        + K * N * 2 * (M // tm)
                        + M * N * jnp.dtype(out_dtype).itemsize
                        + (M * N * residual.dtype.itemsize if has_res else 0)),
    )

    return pl.pallas_call(
        partial(_fused_matmul_kernel, ln=ln, eps=eps, activation=activation,
                has_res=has_res),
        out_shape=jax.ShapeDtypeStruct((M, N), out_dtype),
        grid=grid,
        in_specs=in_specs,
        out_specs=pl.BlockSpec((tm, tn), lambda i, j, k: (i, j)),
        scratch_shapes=scratch,
        compiler_params=pltpu.CompilerParams(
            dimension_semantics=sem, vmem_limit_bytes=32 * 1024 * 1024),
        cost_estimate=cost,
    )(*args)


# ---------------------------------------------------------------------------
# Standalone LayerNorm (final LN only), tiled over rows.
# ---------------------------------------------------------------------------
def _layernorm_kernel(x_ref, g_ref, b_ref, o_ref, *, eps):
    x = x_ref[...]
    mean = jnp.mean(x, axis=-1, keepdims=True)
    var = jnp.mean(jnp.square(x - mean), axis=-1, keepdims=True)
    o_ref[...] = (x - mean) * lax.rsqrt(var + eps) * g_ref[...] + b_ref[...]


def layernorm(x, gamma, beta, eps, tm=512):
    M, D = x.shape
    tm = _pick_tile(M, tm, 8)
    return pl.pallas_call(
        partial(_layernorm_kernel, eps=eps),
        out_shape=jax.ShapeDtypeStruct((M, D), jnp.float32),
        grid=(M // tm,),
        in_specs=[pl.BlockSpec((tm, D), lambda i: (i, 0)),
                  pl.BlockSpec((1, D), lambda i: (0, 0)),
                  pl.BlockSpec((1, D), lambda i: (0, 0))],
        out_specs=pl.BlockSpec((tm, D), lambda i: (i, 0)),
        compiler_params=pltpu.CompilerParams(dimension_semantics=("parallel",)),
    )(x, gamma.reshape(1, D), beta.reshape(1, D))


# ---------------------------------------------------------------------------
# Attention: grid = (batch, head).  BlockSpec delivers per-head (S_pad, dh)
# Q/K/V blocks (input layout [B, nh*3, S_pad, dh]).  Padded keys are masked,
# softmax uses an exact reciprocal, context is written in bf16 and the
# (optional) probabilities in f32.
# ---------------------------------------------------------------------------
def _attention_kernel(qkv_ref, *out_refs, scale, seq_len, seq_pad, return_probs):
    ctx_ref = out_refs[0]
    probs_ref = out_refs[1] if return_probs else None

    q = qkv_ref[0, 0]                                   # [S_pad, dh] bf16
    k = qkv_ref[0, 1]
    v = qkv_ref[0, 2]
    s = lax.dot_general(q, k, (((1,), (1,)), ((), ())),
                        preferred_element_type=jnp.float32) * scale   # [S_pad, S_pad]
    if seq_pad > seq_len:                               # static branch
        key_idx = lax.broadcasted_iota(jnp.int32, s.shape, 1)
        s = jnp.where(key_idx < seq_len, s, -1e30)
    m = jnp.max(s, axis=-1, keepdims=True)
    e = jnp.exp(s - m)
    p = e * (1.0 / jnp.sum(e, axis=-1, keepdims=True))  # exact reciprocal
    if return_probs:
        probs_ref[0, 0] = p
    ctx_ref[0, 0] = jnp.dot(p.astype(jnp.bfloat16), v,
                            preferred_element_type=jnp.float32).astype(ctx_ref.dtype)


def attention(qkv, *, scale, seq_len, return_probs=True):
    B, nh3, S_pad, dh = qkv.shape
    nh = nh3 // 3

    out_shape = [jax.ShapeDtypeStruct((B, nh, S_pad, dh), jnp.bfloat16)]
    out_specs = [pl.BlockSpec((1, 1, S_pad, dh), lambda b, h: (b, h, 0, 0))]
    if return_probs:
        out_shape.append(jax.ShapeDtypeStruct((B, nh, S_pad, S_pad), jnp.float32))
        out_specs.append(pl.BlockSpec((1, 1, S_pad, S_pad), lambda b, h: (b, h, 0, 0)))

    cost = pl.CostEstimate(
        flops=4 * B * nh * S_pad * S_pad * dh,
        transcendentals=B * nh * S_pad * S_pad,
        bytes_accessed=(B * nh * 3 * S_pad * dh * 2 + B * nh * S_pad * dh * 2
                        + (B * nh * S_pad * S_pad * 4 if return_probs else 0)),
    )

    return pl.pallas_call(
        partial(_attention_kernel, scale=scale, seq_len=seq_len, seq_pad=S_pad,
                return_probs=return_probs),
        out_shape=tuple(out_shape) if return_probs else out_shape[0],
        grid=(B, nh),
        in_specs=[pl.BlockSpec((1, 3, S_pad, dh), lambda b, h: (b, h, 0, 0))],
        out_specs=tuple(out_specs) if return_probs else out_specs[0],
        compiler_params=pltpu.CompilerParams(
            dimension_semantics=("parallel", "parallel")),
        cost_estimate=cost,
    )(qkv)


# ---------------------------------------------------------------------------
# Parameter construction (deterministic, synthetic -- no checkpoint load).
# Matmul weights in bf16 (MXU operands); biases / LN params / cls / pos f32.
# ---------------------------------------------------------------------------
def init_params(key, cfg):
    C, p, D, nh, I, L = (cfg["channels"], cfg["patch_size"], cfg["hidden"],
                         cfg["heads"], cfg["intermediate"], cfg["layers"])
    std = 0.02

    def normal_bf16(k, shape):
        return (std * jax.random.normal(k, shape, dtype=jnp.float32)).astype(jnp.bfloat16)

    def normal_f32(k, shape):
        return std * jax.random.normal(k, shape, dtype=jnp.float32)

    keys = jax.random.split(key, 4 + L)
    params = {
        "patch_w": normal_bf16(keys[0], (C * p * p, D)),
        "patch_b": jnp.zeros((D,), jnp.float32),
        "cls_token": normal_f32(keys[1], (1, 1, D)),
        "pos_emb": normal_f32(keys[2], (1, cfg["num_patches"] + 1, D)),
        "lnf_g": jnp.ones((D,), jnp.float32),
        "lnf_b": jnp.zeros((D,), jnp.float32),
        "layers": [],
    }
    for li in range(L):
        lk = jax.random.split(keys[4 + li], 4)
        params["layers"].append({
            "ln1_g": jnp.ones((D,), jnp.float32), "ln1_b": jnp.zeros((D,), jnp.float32),
            # fused Q/K/V projection: [D, 3D] (cols 0:D -> Q, D:2D -> K, 2D:3D -> V)
            "w_qkv": normal_bf16(lk[0], (D, 3 * D)),
            "b_qkv": jnp.zeros((3 * D,), jnp.float32),
            "wo": normal_bf16(lk[1], (D, D)), "bo": jnp.zeros((D,), jnp.float32),
            "ln2_g": jnp.ones((D,), jnp.float32), "ln2_b": jnp.zeros((D,), jnp.float32),
            "w1": normal_bf16(lk[2], (D, I)), "b1": jnp.zeros((I,), jnp.float32),
            "w2": normal_bf16(lk[3], (I, D)), "b2": jnp.zeros((D,), jnp.float32),
        })
    return params


# ---------------------------------------------------------------------------
# Full ViT forward (mirrors HF ViTModel -> last_hidden_state / hidden_states /
# attentions, followed by the module's dropout which is identity at p=0.0)
# ---------------------------------------------------------------------------
def vit_forward(pixel_values, params, cfg):
    B, C, H, W = pixel_values.shape
    p, D, nh = cfg["patch_size"], cfg["hidden"], cfg["heads"]
    dh = D // nh
    eps = cfg["eps"]
    out_attn = cfg.get("output_attentions", True)
    Hp, Wp = H // p, W // p
    Np = Hp * Wp
    S = Np + 1
    # pad the sequence so row tiles reach tm>=128 and [S,S] tiles are lane-dense
    S_pad = _round_up(S, 8) if S <= 64 else _round_up(S, 128)
    scale = 1.0 / math.sqrt(dh)

    # patch embedding: Conv2d(C, D, kernel=p, stride=p) == patchify + matmul
    x = pixel_values.reshape(B, C, Hp, p, Wp, p)
    x = x.transpose(0, 2, 4, 1, 3, 5).reshape(B * Np, C * p * p)
    emb = fused_matmul(x, params["patch_w"], params["patch_b"]).reshape(B, Np, D)

    cls = jnp.broadcast_to(params["cls_token"], (B, 1, D))
    h3 = jnp.concatenate([cls, emb], axis=1) + params["pos_emb"]     # [B, S, D] f32
    h3 = jnp.pad(h3, ((0, 0), (0, S_pad - S), (0, 0)))               # [B, S_pad, D]
    h = h3.reshape(B * S_pad, D)                                     # residual stream (f32)

    all_hidden = [h3[:, :S, :]]
    all_attn = []

    for layer in params["layers"]:
        # --- self-attention block: LN1 fused into the combined QKV projection ---
        qkv = fused_matmul(h, layer["w_qkv"], layer["b_qkv"],
                           gamma=layer["ln1_g"], beta=layer["ln1_b"], eps=eps,
                           out_dtype=jnp.bfloat16)                    # [B*S_pad, 3D] bf16
        # layout plumbing (XLA): per-head [q|k|v] blocks along a (B, nh*3) axis
        qkv = (qkv.reshape(B, S_pad, 3, nh, dh)
                  .transpose(0, 3, 2, 1, 4)
                  .reshape(B, nh * 3, S_pad, dh))
        if out_attn:
            ctx, probs = attention(qkv, scale=scale, seq_len=S, return_probs=True)
            all_attn.append(probs[:, :, :S, :S])
        else:
            ctx = attention(qkv, scale=scale, seq_len=S, return_probs=False)
        ctx2d = ctx.transpose(0, 2, 1, 3).reshape(B * S_pad, D)       # bf16

        # output projection with the residual add fused in the epilogue (f32 out)
        h = fused_matmul(ctx2d, layer["wo"], layer["bo"], residual=h)

        # --- MLP block: LN2 fused into MLP-up (+GELU); residual fused in MLP-down ---
        inter = fused_matmul(h, layer["w1"], layer["b1"],
                             gamma=layer["ln2_g"], beta=layer["ln2_b"],
                             activation="gelu", eps=eps, out_dtype=jnp.bfloat16)
        h = fused_matmul(inter, layer["w2"], layer["b2"], residual=h)

        all_hidden.append(h.reshape(B, S_pad, D)[:, :S, :])

    # final LayerNorm -> last_hidden_state; dropout(p=0.0) is identity
    seq = layernorm(h, params["lnf_g"], params["lnf_b"], eps)
    seq = seq.reshape(B, S_pad, D)[:, :S, :]
    # TODO(synk): pooler / interpolate_pos_encoding branches of HF ViTModel not exercised here.
    return seq, tuple(all_hidden), tuple(all_attn)


if __name__ == "__main__":
    cfg = {
        "channels": 3,
        "image_size": 16,
        "patch_size": 8,
        "hidden": 32,
        "heads": 2,
        "intermediate": 64,
        "layers": 2,
        "eps": 1e-12,
        "output_attentions": True,
    }
    cfg["num_patches"] = (cfg["image_size"] // cfg["patch_size"]) ** 2

    key = jax.random.PRNGKey(0)
    k_pix, k_par = jax.random.split(key)
    pixel_values = jax.random.normal(
        k_pix, (2, cfg["channels"], cfg["image_size"], cfg["image_size"]),
        dtype=jnp.float32)
    params = init_params(k_par, cfg)

    fwd = jax.jit(partial(vit_forward, cfg=cfg))
    seq, hidden_states, attentions = fwd(pixel_values, params)
    jax.block_until_ready(seq)
    jax.block_until_ready(hidden_states)
    jax.block_until_ready(attentions)

    S = cfg["num_patches"] + 1
    assert seq.shape == (2, S, cfg["hidden"])
    assert len(hidden_states) == cfg["layers"] + 1
    assert all(hs.shape == (2, S, cfg["hidden"]) for hs in hidden_states)
    assert len(attentions) == cfg["layers"]
    assert attentions[0].shape == (2, cfg["heads"], S, S)
    # attention rows must sum to ~1 (exact softmax reciprocal is used)
    row_sums = jnp.sum(attentions[0], axis=-1)
    assert bool(jnp.all(jnp.abs(row_sums - 1.0) < 1e-3))
    assert bool(jnp.all(jnp.isfinite(seq)))
    print("KERNEL_OK")
</pallas_src>

<mosaic_0001>
module attributes {stable_mosaic.version = 11 : i64} {
  func.func @_fused_matmul_kernel(%arg0: i32, %arg1: i32, %arg2: i32, %arg3: memref<8x192xf32, #tpu.memory_space<vmem>>, %arg4: memref<192x32xbf16, #tpu.memory_space<vmem>>, %arg5: memref<1x32xf32, #tpu.memory_space<vmem>>, %arg6: memref<8x32xf32, #tpu.memory_space<vmem>>, %arg7: memref<8x32xf32, #tpu.memory_space<vmem>>) attributes {dimension_semantics = [#tpu.dimension_semantics<parallel>, #tpu.dimension_semantics<parallel>, #tpu.dimension_semantics<arbitrary>], iteration_bounds = array<i64: 1, 1, 1>, scalar_prefetch = 0 : i64, scratch_operands = 1 : i64, tpu.core_type = #tpu.core_type<tc>, window_params = [{transform_indices = @transform_0, window_bounds = array<i64: 8, 192>}, {transform_indices = @transform_1, window_bounds = array<i64: 192, 32>}, {transform_indices = @transform_2, window_bounds = array<i64: 1, 32>}, {transform_indices = @transform_3, window_bounds = array<i64: 8, 32>}]} {
    %c0_i32 = arith.constant 0 : i32
    %0 = arith.cmpi eq, %arg2, %c0_i32 : i32
    %1 = arith.extui %0 : i1 to i32
    %c0_i32_0 = arith.constant 0 : i32
    %2 = arith.cmpi ne, %1, %c0_i32_0 : i32
    scf.if %2 {
      %cst_10 = arith.constant 0.000000e+00 : f32
      %13 = vector.broadcast %cst_10 : f32 to vector<8x32xf32>
      %c0_11 = arith.constant 0 : index
      %c0_12 = arith.constant 0 : index
      %14 = vector.load %arg7[%c0_11, %c0_12] : memref<8x32xf32, #tpu.memory_space<vmem>>, vector<8x32xf32>
      tpu.vector_store %arg7[%c0_11, %c0_12], %13 {strides = array<i32>} : memref<8x32xf32, #tpu.memory_space<vmem>>, vector<8x32xf32>,
    } else {
    }
    %c0 = arith.constant 0 : index
    %c0_1 = arith.constant 0 : index
    %3 = vector.load %arg3[%c0, %c0_1] : memref<8x192xf32, #tpu.memory_space<vmem>>, vector<8x192xf32>
    %4 = arith.truncf %3 : vector<8x192xf32> to vector<8x192xbf16>
    %c0_2 = arith.constant 0 : index
    %c0_3 = arith.constant 0 : index
    %5 = vector.load %arg7[%c0_2, %c0_3] : memref<8x32xf32, #tpu.memory_space<vmem>>, vector<8x32xf32>
    %c0_4 = arith.constant 0 : index
    %c0_5 = arith.constant 0 : index
    %6 = vector.load %arg4[%c0_4, %c0_5] : memref<192x32xbf16, #tpu.memory_space<vmem>>, vector<192x32xbf16>
    %cst = arith.constant dense<0.000000e+00> : vector<8x32xf32>
    %7 = tpu.matmul %4, %6, %cst {dimension_numbers = #tpu.dot_dimension_numbers<[1], [0], [0], [1], [0, 0, 1, 1], [], []>} : vector<8x192xbf16>, vector<192x32xbf16>, vector<8x32xf32> -> vector<8x32xf32>
    %8 = arith.addf %5, %7 : vector<8x32xf32>
    %c0_6 = arith.constant 0 : index
    %c0_7 = arith.constant 0 : index
    %9 = vector.load %arg7[%c0_6, %c0_7] : memref<8x32xf32, #tpu.memory_space<vmem>>, vector<8x32xf32>
    tpu.vector_store %arg7[%c0_6, %c0_7], %8 {strides = array<i32>} : memref<8x32xf32, #tpu.memory_space<vmem>>, vector<8x32xf32>,
    %c0_i32_8 = arith.constant 0 : i32
    %10 = arith.cmpi eq, %arg2, %c0_i32_8 : i32
    %11 = arith.extui %10 : i1 to i32
    %c0_i32_9 = arith.constant 0 : i32
    %12 = arith.cmpi ne, %11, %c0_i32_9 : i32
    scf.if %12 {
      %c0_10 = arith.constant 0 : index
      %c0_11 = arith.constant 0 : index
      %13 = vector.load %arg7[%c0_10, %c0_11] : memref<8x32xf32, #tpu.memory_space<vmem>>, vector<8x32xf32>
      %c0_12 = arith.constant 0 : index
      %c0_13 = arith.constant 0 : index
      %14 = vector.load %arg5[%c0_12, %c0_13] : memref<1x32xf32, #tpu.memory_space<vmem>>, vector<1x32xf32>
      %15 = vector.broadcast %14 : vector<1x32xf32> to vector<8x32xf32>
      %16 = arith.addf %13, %15 : vector<8x32xf32>
      %c0_14 = arith.constant 0 : index
      %c0_15 = arith.constant 0 : index
      %17 = vector.load %arg6[%c0_14, %c0_15] : memref<8x32xf32, #tpu.memory_space<vmem>>, vector<8x32xf32>
      tpu.vector_store %arg6[%c0_14, %c0_15], %16 {strides = array<i32>} : memref<8x32xf32, #tpu.memory_space<vmem>>, vector<8x32xf32>,
    } else {
    }
    return
  }
  func.func @transform_0(%arg0: i32, %arg1: i32, %arg2: i32) -> (i32, i32) {
    %c0_i32 = arith.constant 0 : i32
    return %arg0, %arg2 : i32, i32
  }
  func.func @transform_1(%arg0: i32, %arg1: i32, %arg2: i32) -> (i32, i32) {
    %c0_i32 = arith.constant 0 : i32
    return %arg2, %arg1 : i32, i32
  }
  func.func @transform_2(%arg0: i32, %arg1: i32, %arg2: i32) -> (i32, i32) {
    %c0_i32 = arith.constant 0 : i32
    %c0_i32_0 = arith.constant 0 : i32
    return %c0_i32, %arg1 : i32, i32
  }
  func.func @transform_3(%arg0: i32, %arg1: i32, %arg2: i32) -> (i32, i32) {
    %c0_i32 = arith.constant 0 : i32
    return %arg0, %arg1 : i32, i32
  }
}

module attributes {stable_mosaic.version = 11 : i64} {
  func.func @_fused_matmul_kernel(%arg0: i32, %arg1: i32, %arg2: i32, %arg3: memref<16x32xf32, #tpu.memory_space<vmem>>, %arg4: memref<32x96xbf16, #tpu.memory_space<vmem>>, %arg5: memref<1x96xf32, #tpu.memory_space<vmem>>, %arg6: memref<1x32xf32, #tpu.memory_space<vmem>>, %arg7: memref<1x32xf32, #tpu.memory_space<vmem>>, %arg8: memref<16x96xbf16, #tpu.memory_space<vmem>>, %arg9: memref<16x96xf32, #tpu.memory_space<vmem>>, %arg10: memref<16x32xbf16, #tpu.memory_space<vmem>>) attributes {dimension_semantics = [#tpu.dimension_semantics<parallel>, #tpu.dimension_semantics<arbitrary>, #tpu.dimension_semantics<arbitrary>], iteration_bounds = array<i64: 1, 1, 1>, scalar_prefetch = 0 : i64, scratch_operands = 2 : i64, tpu.core_type = #tpu.core_type<tc>, window_params = [{transform_indices = @transform_0, window_bounds = array<i64: 16, 32>}, {transform_indices = @transform_1, window_bounds = array<i64: 32, 96>}, {transform_indices = @transform_2, window_bounds = array<i64: 1, 96>}, {transform_indices = @transform_3, window_bounds = array<i64: 1, 32>}, {transform_indices = @transform_4, window_bounds = array<i64: 1, 32>}, {transform_indices = @transform_5, window_bounds = array<i64: 16, 96>}]} {
    %c0_i32 = arith.constant 0 : i32
    %0 = arith.cmpi eq, %arg2, %c0_i32 : i32
    %1 = arith.extui %0 : i1 to i32
    %c0_i32_0 = arith.constant 0 : i32
    %2 = arith.cmpi ne, %1, %c0_i32_0 : i32
    scf.if %2 {
      %cst_12 = arith.constant 0.000000e+00 : f32
      %15 = vector.broadcast %cst_12 : f32 to vector<16x96xf32>
      %c0_13 = arith.constant 0 : index
      %c0_14 = arith.constant 0 : index
      %16 = vector.load %arg9[%c0_13, %c0_14] : memref<16x96xf32, #tpu.memory_space<vmem>>, vector<16x96xf32>
      tpu.vector_store %arg9[%c0_13, %c0_14], %15 {strides = array<i32>} : memref<16x96xf32, #tpu.memory_space<vmem>>, vector<16x96xf32>,
    } else {
    }
    %c0_i32_1 = arith.constant 0 : i32
    %3 = arith.cmpi eq, %arg1, %c0_i32_1 : i32
    %4 = arith.extui %3 : i1 to i32
    %c0_i32_2 = arith.constant 0 : i32
    %5 = arith.cmpi ne, %4, %c0_i32_2 : i32
    scf.if %5 {
      %c0_12 = arith.constant 0 : index
      %c0_13 = arith.constant 0 : index
      %15 = vector.load %arg3[%c0_12, %c0_13] : memref<16x32xf32, #tpu.memory_space<vmem>>, vector<16x32xf32>
      %cst_14 = arith.constant dense<0.000000e+00> : vector<16xf32>
      %16 = vector.multi_reduction <add>, %15, %cst_14 [1] : vector<16x32xf32> to vector<16xf32>
      %17 = vector.shape_cast %16 : vector<16xf32> to vector<16x1xf32>
      %cst_15 = arith.constant 3.200000e+01 : f32
      %18 = vector.broadcast %cst_15 : f32 to vector<16x1xf32>
      %19 = arith.divf %17, %18 : vector<16x1xf32>
      %20 = vector.broadcast %19 : vector<16x1xf32> to vector<16x32xf32>
      %21 = arith.subf %15, %20 : vector<16x32xf32>
      %22 = arith.mulf %21, %21 : vector<16x32xf32>
      %cst_16 = arith.constant dense<0.000000e+00> : vector<16xf32>
      %23 = vector.multi_reduction <add>, %22, %cst_16 [1] : vector<16x32xf32> to vector<16xf32>
      %24 = vector.shape_cast %23 : vector<16xf32> to vector<16x1xf32>
      %cst_17 = arith.constant 3.200000e+01 : f32
      %25 = vector.broadcast %cst_17 : f32 to vector<16x1xf32>
      %26 = arith.divf %24, %25 : vector<16x1xf32>
      %27 = vector.broadcast %19 : vector<16x1xf32> to vector<16x32xf32>
      %28 = arith.subf %15, %27 : vector<16x32xf32>
      %cst_18 = arith.constant 9.99999996E-13 : f32
      %29 = vector.broadcast %cst_18 : f32 to vector<16x1xf32>
      %30 = arith.addf %26, %29 : vector<16x1xf32>
      %31 = math.rsqrt %30 : vector<16x1xf32>
      %32 = vector.broadcast %31 : vector<16x1xf32> to vector<16x32xf32>
      %33 = arith.mulf %28, %32 : vector<16x32xf32>
      %c0_19 = arith.constant 0 : index
      %c0_20 = arith.constant 0 : index
      %34 = vector.load %arg6[%c0_19, %c0_20] : memref<1x32xf32, #tpu.memory_space<vmem>>, vector<1x32xf32>
      %35 = vector.broadcast %34 : vector<1x32xf32> to vector<16x32xf32>
      %36 = arith.mulf %33, %35 : vector<16x32xf32>
      %c0_21 = arith.constant 0 : index
      %c0_22 = arith.constant 0 : index
      %37 = vector.load %arg7[%c0_21, %c0_22] : memref<1x32xf32, #tpu.memory_space<vmem>>, vector<1x32xf32>
      %38 = vector.broadcast %37 : vector<1x32xf32> to vector<16x32xf32>
      %39 = arith.addf %36, %38 : vector<16x32xf32>
      %40 = arith.truncf %39 : vector<16x32xf32> to vector<16x32xbf16>
      %c0_23 = arith.constant 0 : index
      %c0_24 = arith.constant 0 : index
      %41 = vector.load %arg10[%c0_23, %c0_24] : memref<16x32xbf16, #tpu.memory_space<vmem>>, vector<16x32xbf16>
      tpu.vector_store %arg10[%c0_23, %c0_24], %40 {strides = array<i32>} : memref<16x32xbf16, #tpu.memory_space<vmem>>, vector<16x32xbf16>,
    } else {
    }
    %c0 = arith.constant 0 : index
    %c0_3 = arith.constant 0 : index
    %6 = vector.load %arg10[%c0, %c0_3] : memref<16x32xbf16, #tpu.memory_space<vmem>>, vector<16x32xbf16>
    %c0_4 = arith.constant 0 : index
    %c0_5 = arith.constant 0 : index
    %7 = vector.load %arg9[%c0_4, %c0_5] : memref<16x96xf32, #tpu.memory_space<vmem>>, vector<16x96xf32>
    %c0_6 = arith.constant 0 : index
    %c0_7 = arith.constant 0 : index
    %8 = vector.load %arg4[%c0_6, %c0_7] : memref<32x96xbf16, #tpu.memory_space<vmem>>, vector<32x96xbf16>
    %cst = arith.constant dense<0.000000e+00> : vector<16x96xf32>
    %9 = tpu.matmul %6, %8, %cst {dimension_numbers = #tpu.dot_dimension_numbers<[1], [0], [0], [1], [0, 0, 1, 1], [], []>} : vector<16x32xbf16>, vector<32x96xbf16>, vector<16x96xf32> -> vector<16x96xf32>
    %10 = arith.addf %7, %9 : vector<16x96xf32>
    %c0_8 = arith.constant 0 : index
    %c0_9 = arith.constant 0 : index
    %11 = vector.load %arg9[%c0_8, %c0_9] : memref<16x96xf32, #tpu.memory_space<vmem>>, vector<16x96xf32>
    tpu.vector_store %arg9[%c0_8, %c0_9], %10 {strides = array<i32>} : memref<16x96xf32, #tpu.memory_space<vmem>>, vector<16x96xf32>,
    %c0_i32_10 = arith.constant 0 : i32
    %12 = arith.cmpi eq, %arg2, %c0_i32_10 : i32
    %13 = arith.extui %12 : i1 to i32
    %c0_i32_11 = arith.constant 0 : i32
    %14 = arith.cmpi ne, %13, %c0_i32_11 : i32
    scf.if %14 {
      %c0_12 = arith.constant 0 : index
      %c0_13 = arith.constant 0 : index
      %15 = vector.load %arg9[%c0_12, %c0_13] : memref<16x96xf32, #tpu.memory_space<vmem>>, vector<16x96xf32>
      %c0_14 = arith.constant 0 : index
      %c0_15 = arith.constant 0 : index
      %16 = vector.load %arg5[%c0_14, %c0_15] : memref<1x96xf32, #tpu.memory_space<vmem>>, vector<1x96xf32>
      %17 = vector.broadcast %16 : vector<1x96xf32> to vector<16x96xf32>
      %18 = arith.addf %15, %17 : vector<16x96xf32>
      %19 = arith.truncf %18 : vector<16x96xf32> to vector<16x96xbf16>
      %c0_16 = arith.constant 0 : index
      %c0_17 = arith.constant 0 : index
      %20 = vector.load %arg8[%c0_16, %c0_17] : memref<16x96xbf16, #tpu.memory_space<vmem>>, vector<16x96xbf16>
      tpu.vector_store %arg8[%c0_16, %c0_17], %19 {strides = array<i32>} : memref<16x96xbf16, #tpu.memory_space<vmem>>, vector<16x96xbf16>,
    } else {
    }
    return
  }
  func.func @transform_0(%arg0: i32, %arg1: i32, %arg2: i32) -> (i32, i32) {
    %c0_i32 = arith.constant 0 : i32
    return %arg0, %arg2 : i32, i32
  }
  func.func @transform_1(%arg0: i32, %arg1: i32, %arg2: i32) -> (i32, i32) {
    %c0_i32 = arith.constant 0 : i32
    return %arg2, %arg1 : i32, i32
  }
  func.func @transform_2(%arg0: i32, %arg1: i32, %arg2: i32) -> (i32, i32) {
    %c0_i32 = arith.constant 0 : i32
    %c0_i32_0 = arith.constant 0 : i32
    return %c0_i32, %arg1 : i32, i32
  }
  func.func @transform_3(%arg0: i32, %arg1: i32, %arg2: i32) -> (i32, i32) {
    %c0_i32 = arith.constant 0 : i32
    %c0_i32_0 = arith.constant 0 : i32
    return %c0_i32, %arg2 : i32, i32
  }
  func.func @transform_4(%arg0: i32, %arg1: i32, %arg2: i32) -> (i32, i32) {
    %c0_i32 = arith.constant 0 : i32
    %c0_i32_0 = arith.constant 0 : i32
    return %c0_i32, %arg2 : i32, i32
  }
  func.func @transform_5(%arg0: i32, %arg1: i32, %arg2: i32) -> (i32, i32) {
    %c0_i32 = arith.constant 0 : i32
    return %arg0, %arg1 : i32, i32
  }
}

module attributes {stable_mosaic.version = 11 : i64} {
  func.func @_attention_kernel(%arg0: i32, %arg1: i32, %arg2: memref<1x3x8x16xbf16, #tpu.memory_space<vmem>>, %arg3: memref<1x1x8x16xbf16, #tpu.memory_space<vmem>>, %arg4: memref<1x1x8x8xf32, #tpu.memory_space<vmem>>) attributes {dimension_semantics = [#tpu.dimension_semantics<parallel>, #tpu.dimension_semantics<parallel>], iteration_bounds = array<i64: 2, 2>, scalar_prefetch = 0 : i64, scratch_operands = 0 : i64, tpu.core_type = #tpu.core_type<tc>, window_params = [{transform_indices = @transform_0, window_bounds = array<i64: 1, 3, 8, 16>}, {transform_indices = @transform_1, window_bounds = array<i64: 1, 1, 8, 16>}, {transform_indices = @transform_2, window_bounds = array<i64: 1, 1, 8, 8>}]} {
    %c0 = arith.constant 0 : index
    %c0_0 = arith.constant 0 : index
    %c0_1 = arith.constant 0 : index
    %c0_2 = arith.constant 0 : index
    %0 = vector.load %arg2[%c0, %c0_0, %c0_1, %c0_2] : memref<1x3x8x16xbf16, #tpu.memory_space<vmem>>, vector<1x1x8x16xbf16>
    %1 = vector.shape_cast %0 : vector<1x1x8x16xbf16> to vector<8x16xbf16>
    %c0_3 = arith.constant 0 : index
    %c1 = arith.constant 1 : index
    %c0_4 = arith.constant 0 : index
    %c0_5 = arith.constant 0 : index
    %2 = vector.load %arg2[%c0_3, %c1, %c0_4, %c0_5] : memref<1x3x8x16xbf16, #tpu.memory_space<vmem>>, vector<1x1x8x16xbf16>
    %3 = vector.shape_cast %2 : vector<1x1x8x16xbf16> to vector<8x16xbf16>
    %c0_6 = arith.constant 0 : index
    %c2 = arith.constant 2 : index
    %c0_7 = arith.constant 0 : index
    %c0_8 = arith.constant 0 : index
    %4 = vector.load %arg2[%c0_6, %c2, %c0_7, %c0_8] : memref<1x3x8x16xbf16, #tpu.memory_space<vmem>>, vector<1x1x8x16xbf16>
    %5 = vector.shape_cast %4 : vector<1x1x8x16xbf16> to vector<8x16xbf16>
    %cst = arith.constant dense<0.000000e+00> : vector<8x8xf32>
    %6 = tpu.matmul %1, %3, %cst {dimension_numbers = #tpu.dot_dimension_numbers<[1], [1], [0], [0], [0, 0, 1, 0], [], []>} : vector<8x16xbf16>, vector<8x16xbf16>, vector<8x8xf32> -> vector<8x8xf32>
    %cst_9 = arith.constant 2.500000e-01 : f32
    %7 = vector.broadcast %cst_9 : f32 to vector<8x8xf32>
    %8 = arith.mulf %6, %7 : vector<8x8xf32>
    %9 = tpu.iota {dimensions = array<i32: 1>} : vector<8x8xi32>
    %c5_i32 = arith.constant 5 : i32
    %10 = vector.broadcast %c5_i32 : i32 to vector<8x8xi32>
    %11 = arith.cmpi slt, %9, %10 : vector<8x8xi32>
    %cst_10 = arith.constant -1.000000e+30 : f32
    %12 = vector.broadcast %cst_10 : f32 to vector<8x8xf32>
    %13 = arith.select %11, %8, %12 : vector<8x8xi1>, vector<8x8xf32>
    %cst_11 = arith.constant dense<0xFF800000> : vector<8xf32>
    %14 = vector.multi_reduction <maximumf>, %13, %cst_11 [1] : vector<8x8xf32> to vector<8xf32>
    %15 = vector.shape_cast %14 : vector<8xf32> to vector<8x1xf32>
    %16 = vector.broadcast %15 : vector<8x1xf32> to vector<8x8xf32>
    %17 = arith.subf %13, %16 : vector<8x8xf32>
    %18 = math.exp %17 : vector<8x8xf32>
    %cst_12 = arith.constant dense<0.000000e+00> : vector<8xf32>
    %19 = vector.multi_reduction <add>, %18, %cst_12 [1] : vector<8x8xf32> to vector<8xf32>
    %20 = vector.shape_cast %19 : vector<8xf32> to vector<8x1xf32>
    %cst_13 = arith.constant 1.000000e+00 : f32
    %21 = vector.broadcast %cst_13 : f32 to vector<8x1xf32>
    %22 = arith.divf %21, %20 : vector<8x1xf32>
    %23 = vector.broadcast %22 : vector<8x1xf32> to vector<8x8xf32>
    %24 = arith.mulf %18, %23 : vector<8x8xf32>
    %c0_14 = arith.constant 0 : index
    %c0_15 = arith.constant 0 : index
    %c0_16 = arith.constant 0 : index
    %c0_17 = arith.constant 0 : index
    %25 = vector.load %arg4[%c0_14, %c0_15, %c0_16, %c0_17] : memref<1x1x8x8xf32, #tpu.memory_space<vmem>>, vector<1x1x8x8xf32>
    %26 = vector.shape_cast %25 : vector<1x1x8x8xf32> to vector<8x8xf32>
    %27 = vector.shape_cast %24 : vector<8x8xf32> to vector<1x1x8x8xf32>
    tpu.vector_store %arg4[%c0_14, %c0_15, %c0_16, %c0_17], %27 {strides = array<i32>} : memref<1x1x8x8xf32, #tpu.memory_space<vmem>>, vector<1x1x8x8xf32>,
    %28 = arith.truncf %24 : vector<8x8xf32> to vector<8x8xbf16>
    %cst_18 = arith.constant dense<0.000000e+00> : vector<8x16xf32>
    %29 = tpu.matmul %28, %5, %cst_18 {dimension_numbers = #tpu.dot_dimension_numbers<[1], [0], [0], [1], [0, 0, 1, 1], [], []>} : vector<8x8xbf16>, vector<8x16xbf16>, vector<8x16xf32> -> vector<8x16xf32>
    %30 = arith.truncf %29 : vector<8x16xf32> to vector<8x16xbf16>
    %c0_19 = arith.constant 0 : index
    %c0_20 = arith.constant 0 : index
    %c0_21 = arith.constant 0 : index
    %c0_22 = arith.constant 0 : index
    %31 = vector.load %arg3[%c0_19, %c0_20, %c0_21, %c0_22] : memref<1x1x8x16xbf16, #tpu.memory_space<vmem>>, vector<1x1x8x16xbf16>
    %32 = vector.shape_cast %31 : vector<1x1x8x16xbf16> to vector<8x16xbf16>
    %33 = vector.shape_cast %30 : vector<8x16xbf16> to vector<1x1x8x16xbf16>
    tpu.vector_store %arg3[%c0_19, %c0_20, %c0_21, %c0_22], %33 {strides = array<i32>} : memref<1x1x8x16xbf16, #tpu.memory_space<vmem>>, vector<1x1x8x16xbf16>,
    return
  }
  func.func @transform_0(%arg0: i32, %arg1: i32) -> (i32, i32, i32, i32) {
    %c0_i32 = arith.constant 0 : i32
    %c0_i32_0 = arith.constant 0 : i32
    %c0_i32_1 = arith.constant 0 : i32
    return %arg0, %arg1, %c0_i32, %c0_i32_0 : i32, i32, i32, i32
  }
  func.func @transform_1(%arg0: i32, %arg1: i32) -> (i32, i32, i32, i32) {
    %c0_i32 = arith.constant 0 : i32
    %c0_i32_0 = arith.constant 0 : i32
    %c0_i32_1 = arith.constant 0 : i32
    return %arg0, %arg1, %c0_i32, %c0_i32_0 : i32, i32, i32, i32
  }
  func.func @transform_2(%arg0: i32, %arg1: i32) -> (i32, i32, i32, i32) {
    %c0_i32 = arith.constant 0 : i32
    %c0_i32_0 = arith.constant 0 : i32
    %c0_i32_1 = arith.constant 0 : i32
    return %arg0, %arg1, %c0_i32, %c0_i32_0 : i32, i32, i32, i32
  }
}

module attributes {stable_mosaic.version = 11 : i64} {
  func.func @_fused_matmul_kernel(%arg0: i32, %arg1: i32, %arg2: i32, %arg3: memref<16x32xbf16, #tpu.memory_space<vmem>>, %arg4: memref<32x32xbf16, #tpu.memory_space<vmem>>, %arg5: memref<1x32xf32, #tpu.memory_space<vmem>>, %arg6: memref<16x32xf32, #tpu.memory_space<vmem>>, %arg7: memref<16x32xf32, #tpu.memory_space<vmem>>, %arg8: memref<16x32xf32, #tpu.memory_space<vmem>>) attributes {dimension_semantics = [#tpu.dimension_semantics<parallel>, #tpu.dimension_semantics<parallel>, #tpu.dimension_semantics<arbitrary>], iteration_bounds = array<i64: 1, 1, 1>, scalar_prefetch = 0 : i64, scratch_operands = 1 : i64, tpu.core_type = #tpu.core_type<tc>, window_params = [{transform_indices = @transform_0, window_bounds = array<i64: 16, 32>}, {transform_indices = @transform_1, window_bounds = array<i64: 32, 32>}, {transform_indices = @transform_2, window_bounds = array<i64: 1, 32>}, {transform_indices = @transform_3, window_bounds = array<i64: 16, 32>}, {transform_indices = @transform_4, window_bounds = array<i64: 16, 32>}]} {
    %c0_i32 = arith.constant 0 : i32
    %0 = arith.cmpi eq, %arg2, %c0_i32 : i32
    %1 = arith.extui %0 : i1 to i32
    %c0_i32_0 = arith.constant 0 : i32
    %2 = arith.cmpi ne, %1, %c0_i32_0 : i32
    scf.if %2 {
      %cst_10 = arith.constant 0.000000e+00 : f32
      %12 = vector.broadcast %cst_10 : f32 to vector<16x32xf32>
      %c0_11 = arith.constant 0 : index
      %c0_12 = arith.constant 0 : index
      %13 = vector.load %arg8[%c0_11, %c0_12] : memref<16x32xf32, #tpu.memory_space<vmem>>, vector<16x32xf32>
      tpu.vector_store %arg8[%c0_11, %c0_12], %12 {strides = array<i32>} : memref<16x32xf32, #tpu.memory_space<vmem>>, vector<16x32xf32>,
    } else {
    }
    %c0 = arith.constant 0 : index
    %c0_1 = arith.constant 0 : index
    %3 = vector.load %arg3[%c0, %c0_1] : memref<16x32xbf16, #tpu.memory_space<vmem>>, vector<16x32xbf16>
    %c0_2 = arith.constant 0 : index
    %c0_3 = arith.constant 0 : index
    %4 = vector.load %arg8[%c0_2, %c0_3] : memref<16x32xf32, #tpu.memory_space<vmem>>, vector<16x32xf32>
    %c0_4 = arith.constant 0 : index
    %c0_5 = arith.constant 0 : index
    %5 = vector.load %arg4[%c0_4, %c0_5] : memref<32x32xbf16, #tpu.memory_space<vmem>>, vector<32x32xbf16>
    %cst = arith.constant dense<0.000000e+00> : vector<16x32xf32>
    %6 = tpu.matmul %3, %5, %cst {dimension_numbers = #tpu.dot_dimension_numbers<[1], [0], [0], [1], [0, 0, 1, 1], [], []>} : vector<16x32xbf16>, vector<32x32xbf16>, vector<16x32xf32> -> vector<16x32xf32>
    %7 = arith.addf %4, %6 : vector<16x32xf32>
    %c0_6 = arith.constant 0 : index
    %c0_7 = arith.constant 0 : index
    %8 = vector.load %arg8[%c0_6, %c0_7] : memref<16x32xf32, #tpu.memory_space<vmem>>, vector<16x32xf32>
    tpu.vector_store %arg8[%c0_6, %c0_7], %7 {strides = array<i32>} : memref<16x32xf32, #tpu.memory_space<vmem>>, vector<16x32xf32>,
    %c0_i32_8 = arith.constant 0 : i32
    %9 = arith.cmpi eq, %arg2, %c0_i32_8 : i32
    %10 = arith.extui %9 : i1 to i32
    %c0_i32_9 = arith.constant 0 : i32
    %11 = arith.cmpi ne, %10, %c0_i32_9 : i32
    scf.if %11 {
      %c0_10 = arith.constant 0 : index
      %c0_11 = arith.constant 0 : index
      %12 = vector.load %arg8[%c0_10, %c0_11] : memref<16x32xf32, #tpu.memory_space<vmem>>, vector<16x32xf32>
      %c0_12 = arith.constant 0 : index
      %c0_13 = arith.constant 0 : index
      %13 = vector.load %arg5[%c0_12, %c0_13] : memref<1x32xf32, #tpu.memory_space<vmem>>, vector<1x32xf32>
      %14 = vector.broadcast %13 : vector<1x32xf32> to vector<16x32xf32>
      %15 = arith.addf %12, %14 : vector<16x32xf32>
      %c0_14 = arith.constant 0 : index
      %c0_15 = arith.constant 0 : index
      %16 = vector.load %arg6[%c0_14, %c0_15] : memref<16x32xf32, #tpu.memory_space<vmem>>, vector<16x32xf32>
      %17 = arith.addf %15, %16 : vector<16x32xf32>
      %c0_16 = arith.constant 0 : index
      %c0_17 = arith.constant 0 : index
      %18 = vector.load %arg7[%c0_16, %c0_17] : memref<16x32xf32, #tpu.memory_space<vmem>>, vector<16x32xf32>
      tpu.vector_store %arg7[%c0_16, %c0_17], %17 {strides = array<i32>} : memref<16x32xf32, #tpu.memory_space<vmem>>, vector<16x32xf32>,
    } else {
    }
    return
  }
  func.func @transform_0(%arg0: i32, %arg1: i32, %arg2: i32) -> (i32, i32) {
    %c0_i32 = arith.constant 0 : i32
    return %arg0, %arg2 : i32, i32
  }
  func.func @transform_1(%arg0: i32, %arg1: i32, %arg2: i32) -> (i32, i32) {
    %c0_i32 = arith.constant 0 : i32
    return %arg2, %arg1 : i32, i32
  }
  func.func @transform_2(%arg0: i32, %arg1: i32, %arg2: i32) -> (i32, i32) {
    %c0_i32 = arith.constant 0 : i32
    %c0_i32_0 = arith.constant 0 : i32
    return %c0_i32, %arg1 : i32, i32
  }
  func.func @transform_3(%arg0: i32, %arg1: i32, %arg2: i32) -> (i32, i32) {
    %c0_i32 = arith.constant 0 : i32
    return %arg0, %arg1 : i32, i32
  }
  func.func @transform_4(%arg0: i32, %arg1: i32, %arg2: i32) -> (i32, i32) {
    %c0_i32 = arith.constant 0 : i32
    return %arg0, %arg1 : i32, i32
  }
}

module attributes {stable_mosaic.version = 11 : i64} {
  func.func @_fused_matmul_kernel(%arg0: i32, %arg1: i32, %arg2: i32, %arg3: memref<16x32xf32, #tpu.memory_space<vmem>>, %arg4: memref<32x64xbf16, #tpu.memory_space<vmem>>, %arg5: memref<1x64xf32, #tpu.memory_space<vmem>>, %arg6: memref<1x32xf32, #tpu.memory_space<vmem>>, %arg7: memref<1x32xf32, #tpu.memory_space<vmem>>, %arg8: memref<16x64xbf16, #tpu.memory_space<vmem>>, %arg9: memref<16x64xf32, #tpu.memory_space<vmem>>, %arg10: memref<16x32xbf16, #tpu.memory_space<vmem>>) attributes {dimension_semantics = [#tpu.dimension_semantics<parallel>, #tpu.dimension_semantics<arbitrary>, #tpu.dimension_semantics<arbitrary>], iteration_bounds = array<i64: 1, 1, 1>, scalar_prefetch = 0 : i64, scratch_operands = 2 : i64, tpu.core_type = #tpu.core_type<tc>, window_params = [{transform_indices = @transform_0, window_bounds = array<i64: 16, 32>}, {transform_indices = @transform_1, window_bounds = array<i64: 32, 64>}, {transform_indices = @transform_2, window_bounds = array<i64: 1, 64>}, {transform_indices = @transform_3, window_bounds = array<i64: 1, 32>}, {transform_indices = @transform_4, window_bounds = array<i64: 1, 32>}, {transform_indices = @transform_5, window_bounds = array<i64: 16, 64>}]} {
    %c0_i32 = arith.constant 0 : i32
    %0 = arith.cmpi eq, %arg2, %c0_i32 : i32
    %1 = arith.extui %0 : i1 to i32
    %c0_i32_0 = arith.constant 0 : i32
    %2 = arith.cmpi ne, %1, %c0_i32_0 : i32
    scf.if %2 {
      %cst_12 = arith.constant 0.000000e+00 : f32
      %15 = vector.broadcast %cst_12 : f32 to vector<16x64xf32>
      %c0_13 = arith.constant 0 : index
      %c0_14 = arith.constant 0 : index
      %16 = vector.load %arg9[%c0_13, %c0_14] : memref<16x64xf32, #tpu.memory_space<vmem>>, vector<16x64xf32>
      tpu.vector_store %arg9[%c0_13, %c0_14], %15 {strides = array<i32>} : memref<16x64xf32, #tpu.memory_space<vmem>>, vector<16x64xf32>,
    } else {
    }
    %c0_i32_1 = arith.constant 0 : i32
    %3 = arith.cmpi eq, %arg1, %c0_i32_1 : i32
    %4 = arith.extui %3 : i1 to i32
    %c0_i32_2 = arith.constant 0 : i32
    %5 = arith.cmpi ne, %4, %c0_i32_2 : i32
    scf.if %5 {
      %c0_12 = arith.constant 0 : index
      %c0_13 = arith.constant 0 : index
      %15 = vector.load %arg3[%c0_12, %c0_13] : memref<16x32xf32, #tpu.memory_space<vmem>>, vector<16x32xf32>
      %cst_14 = arith.constant dense<0.000000e+00> : vector<16xf32>
      %16 = vector.multi_reduction <add>, %15, %cst_14 [1] : vector<16x32xf32> to vector<16xf32>
      %17 = vector.shape_cast %16 : vector<16xf32> to vector<16x1xf32>
      %cst_15 = arith.constant 3.200000e+01 : f32
      %18 = vector.broadcast %cst_15 : f32 to vector<16x1xf32>
      %19 = arith.divf %17, %18 : vector<16x1xf32>
      %20 = vector.broadcast %19 : vector<16x1xf32> to vector<16x32xf32>
      %21 = arith.subf %15, %20 : vector<16x32xf32>
      %22 = arith.mulf %21, %21 : vector<16x32xf32>
      %cst_16 = arith.constant dense<0.000000e+00> : vector<16xf32>
      %23 = vector.multi_reduction <add>, %22, %cst_16 [1] : vector<16x32xf32> to vector<16xf32>
      %24 = vector.shape_cast %23 : vector<16xf32> to vector<16x1xf32>
      %cst_17 = arith.constant 3.200000e+01 : f32
      %25 = vector.broadcast %cst_17 : f32 to vector<16x1xf32>
      %26 = arith.divf %24, %25 : vector<16x1xf32>
      %27 = vector.broadcast %19 : vector<16x1xf32> to vector<16x32xf32>
      %28 = arith.subf %15, %27 : vector<16x32xf32>
      %cst_18 = arith.constant 9.99999996E-13 : f32
      %29 = vector.broadcast %cst_18 : f32 to vector<16x1xf32>
      %30 = arith.addf %26, %29 : vector<16x1xf32>
      %31 = math.rsqrt %30 : vector<16x1xf32>
      %32 = vector.broadcast %31 : vector<16x1xf32> to vector<16x32xf32>
      %33 = arith.mulf %28, %32 : vector<16x32xf32>
      %c0_19 = arith.constant 0 : index
      %c0_20 = arith.constant 0 : index
      %34 = vector.load %arg6[%c0_19, %c0_20] : memref<1x32xf32, #tpu.memory_space<vmem>>, vector<1x32xf32>
      %35 = vector.broadcast %34 : vector<1x32xf32> to vector<16x32xf32>
      %36 = arith.mulf %33, %35 : vector<16x32xf32>
      %c0_21 = arith.constant 0 : index
      %c0_22 = arith.constant 0 : index
      %37 = vector.load %arg7[%c0_21, %c0_22] : memref<1x32xf32, #tpu.memory_space<vmem>>, vector<1x32xf32>
      %38 = vector.broadcast %37 : vector<1x32xf32> to vector<16x32xf32>
      %39 = arith.addf %36, %38 : vector<16x32xf32>
      %40 = arith.truncf %39 : vector<16x32xf32> to vector<16x32xbf16>
      %c0_23 = arith.constant 0 : index
      %c0_24 = arith.constant 0 : index
      %41 = vector.load %arg10[%c0_23, %c0_24] : memref<16x32xbf16, #tpu.memory_space<vmem>>, vector<16x32xbf16>
      tpu.vector_store %arg10[%c0_23, %c0_24], %40 {strides = array<i32>} : memref<16x32xbf16, #tpu.memory_space<vmem>>, vector<16x32xbf16>,
    } else {
    }
    %c0 = arith.constant 0 : index
    %c0_3 = arith.constant 0 : index
    %6 = vector.load %arg10[%c0, %c0_3] : memref<16x32xbf16, #tpu.memory_space<vmem>>, vector<16x32xbf16>
    %c0_4 = arith.constant 0 : index
    %c0_5 = arith.constant 0 : index
    %7 = vector.load %arg9[%c0_4, %c0_5] : memref<16x64xf32, #tpu.memory_space<vmem>>, vector<16x64xf32>
    %c0_6 = arith.constant 0 : index
    %c0_7 = arith.constant 0 : index
    %8 = vector.load %arg4[%c0_6, %c0_7] : memref<32x64xbf16, #tpu.memory_space<vmem>>, vector<32x64xbf16>
    %cst = arith.constant dense<0.000000e+00> : vector<16x64xf32>
    %9 = tpu.matmul %6, %8, %cst {dimension_numbers = #tpu.dot_dimension_numbers<[1], [0], [0], [1], [0, 0, 1, 1], [], []>} : vector<16x32xbf16>, vector<32x64xbf16>, vector<16x64xf32> -> vector<16x64xf32>
    %10 = arith.addf %7, %9 : vector<16x64xf32>
    %c0_8 = arith.constant 0 : index
    %c0_9 = arith.constant 0 : index
    %11 = vector.load %arg9[%c0_8, %c0_9] : memref<16x64xf32, #tpu.memory_space<vmem>>, vector<16x64xf32>
    tpu.vector_store %arg9[%c0_8, %c0_9], %10 {strides = array<i32>} : memref<16x64xf32, #tpu.memory_space<vmem>>, vector<16x64xf32>,
    %c0_i32_10 = arith.constant 0 : i32
    %12 = arith.cmpi eq, %arg2, %c0_i32_10 : i32
    %13 = arith.extui %12 : i1 to i32
    %c0_i32_11 = arith.constant 0 : i32
    %14 = arith.cmpi ne, %13, %c0_i32_11 : i32
    scf.if %14 {
      %c0_12 = arith.constant 0 : index
      %c0_13 = arith.constant 0 : index
      %15 = vector.load %arg9[%c0_12, %c0_13] : memref<16x64xf32, #tpu.memory_space<vmem>>, vector<16x64xf32>
      %c0_14 = arith.constant 0 : index
      %c0_15 = arith.constant 0 : index
      %16 = vector.load %arg5[%c0_14, %c0_15] : memref<1x64xf32, #tpu.memory_space<vmem>>, vector<1x64xf32>
      %17 = vector.broadcast %16 : vector<1x64xf32> to vector<16x64xf32>
      %18 = arith.addf %15, %17 : vector<16x64xf32>
      %cst_16 = arith.constant 5.000000e-01 : f32
      %19 = vector.broadcast %cst_16 : f32 to vector<16x64xf32>
      %20 = arith.mulf %19, %18 : vector<16x64xf32>
      %cst_17 = arith.constant 0.707106769 : f32
      %21 = vector.broadcast %cst_17 : f32 to vector<16x64xf32>
      %22 = arith.mulf %18, %21 : vector<16x64xf32>
      %23 = math.erf %22 : vector<16x64xf32>
      %cst_18 = arith.constant 1.000000e+00 : f32
      %24 = vector.broadcast %cst_18 : f32 to vector<16x64xf32>
      %25 = arith.addf %24, %23 : vector<16x64xf32>
      %26 = arith.mulf %20, %25 : vector<16x64xf32>
      %27 = arith.truncf %26 : vector<16x64xf32> to vector<16x64xbf16>
      %c0_19 = arith.constant 0 : index
      %c0_20 = arith.constant 0 : index
      %28 = vector.load %arg8[%c0_19, %c0_20] : memref<16x64xbf16, #tpu.memory_space<vmem>>, vector<16x64xbf16>
      tpu.vector_store %arg8[%c0_19, %c0_20], %27 {strides = array<i32>} : memref<16x64xbf16, #tpu.memory_space<vmem>>, vector<16x64xbf16>,
    } else {
    }
    return
  }
  func.func @transform_0(%arg0: i32, %arg1: i32, %arg2: i32) -> (i32, i32) {
    %c0_i32 = arith.constant 0 : i32
    return %arg0, %arg2 : i32, i32
  }
  func.func @transform_1(%arg0: i32, %arg1: i32, %arg2: i32) -> (i32, i32) {
    %c0_i32 = arith.constant 0 : i32
    return %arg2, %arg1 : i32, i32
  }
  func.func @transform_2(%arg0: i32, %arg1: i32, %arg2: i32) -> (i32, i32) {
    %c0_i32 = arith.constant 0 : i32
    %c0_i32_0 = arith.constant 0 : i32
    return %c0_i32, %arg1 : i32, i32
  }
  func.func @transform_3(%arg0: i32, %arg1: i32, %arg2: i32) -> (i32, i32) {
    %c0_i32 = arith.constant 0 : i32
    %c0_i32_0 = arith.constant 0 : i32
    return %c0_i32, %arg2 : i32, i32
  }
  func.func @transform_4(%arg0: i32, %arg1: i32, %arg2: i32) -> (i32, i32) {
    %c0_i32 = arith.constant 0 : i32
    %c0_i32_0 = arith.constant 0 : i32
    return %c0_i32, %arg2 : i32, i32
  }
  func.func @transform_5(%arg0: i32, %arg1: i32, %arg2: i32) -> (i32, i32) {
    %c0_i32 = arith.constant 0 : i32
    return %arg0, %arg1 : i32, i32
  }
}

module attributes {stable_mosaic.version = 11 : i64} {
  func.func @_fused_matmul_kernel(%arg0: i32, %arg1: i32, %arg2: i32, %arg3: memref<16x64xbf16, #tpu.memory_space<vmem>>, %arg4: memref<64x32xbf16, #tpu.memory_space<vmem>>, %arg5: memref<1x32xf32, #tpu.memory_space<vmem>>, %arg6: memref<16x32xf32, #tpu.memory_space<vmem>>, %arg7: memref<16x32xf32, #tpu.memory_space<vmem>>, %arg8: memref<16x32xf32, #tpu.memory_space<vmem>>) attributes {dimension_semantics = [#tpu.dimension_semantics<parallel>, #tpu.dimension_semantics<parallel>, #tpu.dimension_semantics<arbitrary>], iteration_bounds = array<i64: 1, 1, 1>, scalar_prefetch = 0 : i64, scratch_operands = 1 : i64, tpu.core_type = #tpu.core_type<tc>, window_params = [{transform_indices = @transform_0, window_bounds = array<i64: 16, 64>}, {transform_indices = @transform_1, window_bounds = array<i64: 64, 32>}, {transform_indices = @transform_2, window_bounds = array<i64: 1, 32>}, {transform_indices = @transform_3, window_bounds = array<i64: 16, 32>}, {transform_indices = @transform_4, window_bounds = array<i64: 16, 32>}]} {
    %c0_i32 = arith.constant 0 : i32
    %0 = arith.cmpi eq, %arg2, %c0_i32 : i32
    %1 = arith.extui %0 : i1 to i32
    %c0_i32_0 = arith.constant 0 : i32
    %2 = arith.cmpi ne, %1, %c0_i32_0 : i32
    scf.if %2 {
      %cst_10 = arith.constant 0.000000e+00 : f32
      %12 = vector.broadcast %cst_10 : f32 to vector<16x32xf32>
      %c0_11 = arith.constant 0 : index
      %c0_12 = arith.constant 0 : index
      %13 = vector.load %arg8[%c0_11, %c0_12] : memref<16x32xf32, #tpu.memory_space<vmem>>, vector<16x32xf32>
      tpu.vector_store %arg8[%c0_11, %c0_12], %12 {strides = array<i32>} : memref<16x32xf32, #tpu.memory_space<vmem>>, vector<16x32xf32>,
    } else {
    }
    %c0 = arith.constant 0 : index
    %c0_1 = arith.constant 0 : index
    %3 = vector.load %arg3[%c0, %c0_1] : memref<16x64xbf16, #tpu.memory_space<vmem>>, vector<16x64xbf16>
    %c0_2 = arith.constant 0 : index
    %c0_3 = arith.constant 0 : index
    %4 = vector.load %arg8[%c0_2, %c0_3] : memref<16x32xf32, #tpu.memory_space<vmem>>, vector<16x32xf32>
    %c0_4 = arith.constant 0 : index
    %c0_5 = arith.constant 0 : index
    %5 = vector.load %arg4[%c0_4, %c0_5] : memref<64x32xbf16, #tpu.memory_space<vmem>>, vector<64x32xbf16>
    %cst = arith.constant dense<0.000000e+00> : vector<16x32xf32>
    %6 = tpu.matmul %3, %5, %cst {dimension_numbers = #tpu.dot_dimension_numbers<[1], [0], [0], [1], [0, 0, 1, 1], [], []>} : vector<16x64xbf16>, vector<64x32xbf16>, vector<16x32xf32> -> vector<16x32xf32>
    %7 = arith.addf %4, %6 : vector<16x32xf32>
    %c0_6 = arith.constant 0 : index
    %c0_7 = arith.constant 0 : index
    %8 = vector.load %arg8[%c0_6, %c0_7] : memref<16x32xf32, #tpu.memory_space<vmem>>, vector<16x32xf32>
    tpu.vector_store %arg8[%c0_6, %c0_7], %7 {strides = array<i32>} : memref<16x32xf32, #tpu.memory_space<vmem>>, vector<16x32xf32>,
    %c0_i32_8 = arith.constant 0 : i32
    %9 = arith.cmpi eq, %arg2, %c0_i32_8 : i32
    %10 = arith.extui %9 : i1 to i32
    %c0_i32_9 = arith.constant 0 : i32
    %11 = arith.cmpi ne, %10, %c0_i32_9 : i32
    scf.if %11 {
      %c0_10 = arith.constant 0 : index
      %c0_11 = arith.constant 0 : index
      %12 = vector.load %arg8[%c0_10, %c0_11] : memref<16x32xf32, #tpu.memory_space<vmem>>, vector<16x32xf32>
      %c0_12 = arith.constant 0 : index
      %c0_13 = arith.constant 0 : index
      %13 = vector.load %arg5[%c0_12, %c0_13] : memref<1x32xf32, #tpu.memory_space<vmem>>, vector<1x32xf32>
      %14 = vector.broadcast %13 : vector<1x32xf32> to vector<16x32xf32>
      %15 = arith.addf %12, %14 : vector<16x32xf32>
      %c0_14 = arith.constant 0 : index
      %c0_15 = arith.constant 0 : index
      %16 = vector.load %arg6[%c0_14, %c0_15] : memref<16x32xf32, #tpu.memory_space<vmem>>, vector<16x32xf32>
      %17 = arith.addf %15, %16 : vector<16x32xf32>
      %c0_16 = arith.constant 0 : index
      %c0_17 = arith.constant 0 : index
      %18 = vector.load %arg7[%c0_16, %c0_17] : memref<16x32xf32, #tpu.memory_space<vmem>>, vector<16x32xf32>
      tpu.vector_store %arg7[%c0_16, %c0_17], %17 {strides = array<i32>} : memref<16x32xf32, #tpu.memory_space<vmem>>, vector<16x32xf32>,
    } else {
    }
    return
  }
  func.func @transform_0(%arg0: i32, %arg1: i32, %arg2: i32) -> (i32, i32) {
    %c0_i32 = arith.constant 0 : i32
    return %arg0, %arg2 : i32, i32
  }
  func.func @transform_1(%arg0: i32, %arg1: i32, %arg2: i32) -> (i32, i32) {
    %c0_i32 = arith.constant 0 : i32
    return %arg2, %arg1 : i32, i32
  }
  func.func @transform_2(%arg0: i32, %arg1: i32, %arg2: i32) -> (i32, i32) {
    %c0_i32 = arith.constant 0 : i32
    %c0_i32_0 = arith.constant 0 : i32
    return %c0_i32, %arg1 : i32, i32
  }
  func.func @transform_3(%arg0: i32, %arg1: i32, %arg2: i32) -> (i32, i32) {
    %c0_i32 = arith.constant 0 : i32
    return %arg0, %arg1 : i32, i32
  }
  func.func @transform_4(%arg0: i32, %arg1: i32, %arg2: i32) -> (i32, i32) {
    %c0_i32 = arith.constant 0 : i32
    return %arg0, %arg1 : i32, i32
  }
}

module attributes {stable_mosaic.version = 11 : i64} {
  func.func @_layernorm_kernel(%arg0: i32, %arg1: memref<16x32xf32, #tpu.memory_space<vmem>>, %arg2: memref<1x32xf32, #tpu.memory_space<vmem>>, %arg3: memref<1x32xf32, #tpu.memory_space<vmem>>, %arg4: memref<16x32xf32, #tpu.memory_space<vmem>>) attributes {dimension_semantics = [#tpu.dimension_semantics<parallel>], iteration_bounds = array<i64: 1>, scalar_prefetch = 0 : i64, scratch_operands = 0 : i64, tpu.core_type = #tpu.core_type<tc>, window_params = [{transform_indices = @transform_0, window_bounds = array<i64: 16, 32>}, {pipeline_mode = #tpu.pipeline_mode<synchronous>, transform_indices = @transform_1, window_bounds = array<i64: 1, 32>}, {pipeline_mode = #tpu.pipeline_mode<synchronous>, transform_indices = @transform_2, window_bounds = array<i64: 1, 32>}, {transform_indices = @transform_3, window_bounds = array<i64: 16, 32>}]} {
    %c0 = arith.constant 0 : index
    %c0_0 = arith.constant 0 : index
    %0 = vector.load %arg1[%c0, %c0_0] : memref<16x32xf32, #tpu.memory_space<vmem>>, vector<16x32xf32>
    %cst = arith.constant dense<0.000000e+00> : vector<16xf32>
    %1 = vector.multi_reduction <add>, %0, %cst [1] : vector<16x32xf32> to vector<16xf32>
    %2 = vector.shape_cast %1 : vector<16xf32> to vector<16x1xf32>
    %cst_1 = arith.constant 3.200000e+01 : f32
    %3 = vector.broadcast %cst_1 : f32 to vector<16x1xf32>
    %4 = arith.divf %2, %3 : vector<16x1xf32>
    %5 = vector.broadcast %4 : vector<16x1xf32> to vector<16x32xf32>
    %6 = arith.subf %0, %5 : vector<16x32xf32>
    %7 = arith.mulf %6, %6 : vector<16x32xf32>
    %cst_2 = arith.constant dense<0.000000e+00> : vector<16xf32>
    %8 = vector.multi_reduction <add>, %7, %cst_2 [1] : vector<16x32xf32> to vector<16xf32>
    %9 = vector.shape_cast %8 : vector<16xf32> to vector<16x1xf32>
    %cst_3 = arith.constant 3.200000e+01 : f32
    %10 = vector.broadcast %cst_3 : f32 to vector<16x1xf32>
    %11 = arith.divf %9, %10 : vector<16x1xf32>
    %12 = vector.broadcast %4 : vector<16x1xf32> to vector<16x32xf32>
    %13 = arith.subf %0, %12 : vector<16x32xf32>
    %cst_4 = arith.constant 9.99999996E-13 : f32
    %14 = vector.broadcast %cst_4 : f32 to vector<16x1xf32>
    %15 = arith.addf %11, %14 : vector<16x1xf32>
    %16 = math.rsqrt %15 : vector<16x1xf32>
    %17 = vector.broadcast %16 : vector<16x1xf32> to vector<16x32xf32>
    %18 = arith.mulf %13, %17 : vector<16x32xf32>
    %c0_5 = arith.constant 0 : index
    %c0_6 = arith.constant 0 : index
    %19 = vector.load %arg2[%c0_5, %c0_6] : memref<1x32xf32, #tpu.memory_space<vmem>>, vector<1x32xf32>
    %20 = vector.broadcast %19 : vector<1x32xf32> to vector<16x32xf32>
    %21 = arith.mulf %18, %20 : vector<16x32xf32>
    %c0_7 = arith.constant 0 : index
    %c0_8 = arith.constant 0 : index
    %22 = vector.load %arg3[%c0_7, %c0_8] : memref<1x32xf32, #tpu.memory_space<vmem>>, vector<1x32xf32>
    %23 = vector.broadcast %22 : vector<1x32xf32> to vector<16x32xf32>
    %24 = arith.addf %21, %23 : vector<16x32xf32>
    %c0_9 = arith.constant 0 : index
    %c0_10 = arith.constant 0 : index
    %25 = vector.load %arg4[%c0_9, %c0_10] : memref<16x32xf32, #tpu.memory_space<vmem>>, vector<16x32xf32>
    tpu.vector_store %arg4[%c0_9, %c0_10], %24 {strides = array<i32>} : memref<16x32xf32, #tpu.memory_space<vmem>>, vector<16x32xf32>,
    return
  }
  func.func @transform_0(%arg0: i32) -> (i32, i32) {
    %c0_i32 = arith.constant 0 : i32
    %c0_i32_0 = arith.constant 0 : i32
    return %arg0, %c0_i32 : i32, i32
  }
  func.func @transform_1(%arg0: i32) -> (i32, i32) {
    %c0_i32 = arith.constant 0 : i32
    %c0_i32_0 = arith.constant 0 : i32
    %c0_i32_1 = arith.constant 0 : i32
    return %c0_i32, %c0_i32_0 : i32, i32
  }
  func.func @transform_2(%arg0: i32) -> (i32, i32) {
    %c0_i32 = arith.constant 0 : i32
    %c0_i32_0 = arith.constant 0 : i32
    %c0_i32_1 = arith.constant 0 : i32
    return %c0_i32, %c0_i32_0 : i32, i32
  }
  func.func @transform_3(%arg0: i32) -> (i32, i32) {
    %c0_i32 = arith.constant 0 : i32
    %c0_i32_0 = arith.constant 0 : i32
    return %arg0, %c0_i32 : i32, i32
  }
}

</mosaic_0001>

<llo_original>
// kernel: vit_forward.12
$region0: #{vit_forward.12}
  #allocation0 [shape = 'u32[]', space=smem, size = 0x4, offset = 0x4, fixed_abs, tag = 'smem constant byte address 0x4 - core index']
  #allocation1 [shape = 'u32[144,128]{1,0:T(1,128)}', space=vmem, size = 0x12000, scoped, tag = 'internal scratch']
  #allocation2 [shape = 'f32[8,32]{1,0:T(8,128)}', space=vmem, size = 0x1000, scoped, tag = 'scratch operand']
  %s0 = inlined_call_operand.vmem [shape: f32[8,192], index: 0, kind: input, shape index: {}]
  %s1 = inlined_call_operand.vmem [shape: bf16[192,32], index: 1, kind: input, shape index: {}]
  %s2 = inlined_call_operand.vmem [shape: f32[1,32], index: 2, kind: input, shape index: {}]
  %s3 = inlined_call_operand.vmem [shape: f32[8,32], index: 3, kind: output, shape index: {}]
  %s4 = sld [smem:[#allocation0]]
  $region30: #{vit_forward.12} parent=0
    _
  %s6 = ssub.s32 1, %s4
  %s7 = scalar_select 0, %s6, %s4
  // Predicated region
  $region2: #{vit_forward.12} parent=0 // pred_check
    _
  $region3: #{vit_forward.12} parent=0 // pred_check_branch
    %9 = sbr.rel (0) target = $region5
  $region4: #{vit_forward.12} parent=0 // pred_region
    _
  $region5: #{vit_forward.12} parent=0 // pred_fallthru
    _
  // Predicated region
  $region6: #{vit_forward.12} parent=0 // pred_check
    _
  $region7: #{vit_forward.12} parent=0 // pred_check_branch
    %11 = sbr.rel (0) target = $region9
  $region8: #{vit_forward.12} parent=0 // pred_region
    _
  $region9: #{vit_forward.12} parent=0 // pred_fallthru
    _
  // Predicated region
  $region10: #{vit_forward.12} parent=0 // pred_check
    _
  $region11: #{vit_forward.12} parent=0 // pred_check_branch
    %13 = sbr.rel (0) target = $region13
  $region12: #{vit_forward.12} parent=0 // pred_region
    _
  $region13: #{vit_forward.12} parent=0 // pred_fallthru
    _
  %p15 = scmp.eq.s32.totalorder 0, 0
  // Predicated region
  $region14: #{vit_forward.12} parent=0 // pred_check
    %p16 = pneg %p15
  $region15: #{vit_forward.12} parent=0 // pred_check_branch
    %18 = sbr.rel (%p16) target = $region17
  $region16: #{vit_forward.12} parent=0 // pred_region
    %vm19 = vcmask 261120
    %20 = vst.msk [vmem:[#allocation2] sm:$0xff] %vm19, 0.0
  $region17: #{vit_forward.12} parent=0 // pred_fallthru
    _
  %v21 = vld [vmem:[%s0] sm:$0xff]
  %v22 = vld [vmem:[%s0 + $0x8] sm:$0xff]
  %v23 = vpack.c.bf16 %v21, %v21
  %v24 = vpack.c.bf16 %v22, %v22
  %v25 = vld [vmem:[#allocation2] sm:$0xff]
  %v26 = vld [vmem:[%s1] sm:$0xf]
  %v27 = vld [vmem:[%s1 + $0x4] sm:$0xf]
  %v28 = vld [vmem:[%s1 + $0x8] sm:$0xf]
  %v29 = vld [vmem:[%s1 + $0xc] sm:$0xf]
  %v30 = vld [vmem:[%s1 + $0x10] sm:$0xf]
  %v31 = vld [vmem:[%s1 + $0x14] sm:$0xf]
  %v32 = vld [vmem:[%s1 + $0x18] sm:$0xf]
  %v33 = vld [vmem:[%s1 + $0x1c] sm:$0xf]
  %v34 = vld [vmem:[%s1 + $0x20] sm:$0xf]
  %v35 = vld [vmem:[%s1 + $0x24] sm:$0xf]
  %v36 = vld [vmem:[%s1 + $0x28] sm:$0xf]
  %v37 = vld [vmem:[%s1 + $0x2c] sm:$0xf]
  %v38 = vld [vmem:[%s1 + $0x30] sm:$0xf]
  %v39 = vld [vmem:[%s1 + $0x34] sm:$0xf]
  %v40 = vld [vmem:[%s1 + $0x38] sm:$0xf]
  %v41 = vld [vmem:[%s1 + $0x3c] sm:$0xf]
  %v42 = vld [vmem:[%s1 + $0x40] sm:$0xf]
  %v43 = vld [vmem:[%s1 + $0x44] sm:$0xf]
  %v44 = vld [vmem:[%s1 + $0x48] sm:$0xf]
  %v45 = vld [vmem:[%s1 + $0x4c] sm:$0xf]
  %v46 = vld [vmem:[%s1 + $0x50] sm:$0xf]
  %v47 = vld [vmem:[%s1 + $0x54] sm:$0xf]
  %v48 = vld [vmem:[%s1 + $0x58] sm:$0xf]
  %v49 = vld [vmem:[%s1 + $0x5c] sm:$0xf]
  %v74 = vunpack.c.l.b16 %v26
  %v75 = vunpack.c.l.b16 %v27
  %v76 = vunpack.c.l.b16 %v28
  %v77 = vunpack.c.l.b16 %v29
  %v78 = vunpack.c.l.b16 %v30
  %v79 = vunpack.c.l.b16 %v31
  %v80 = vunpack.c.l.b16 %v32
  %v81 = vunpack.c.l.b16 %v33
  %v82 = vunpack.c.l.b16 %v34
  %v83 = vunpack.c.l.b16 %v35
  %v84 = vunpack.c.l.b16 %v36
  %v85 = vunpack.c.l.b16 %v37
  %v86 = vunpack.c.l.b16 %v38
  %v87 = vunpack.c.l.b16 %v39
  %v88 = vunpack.c.l.b16 %v40
  %v89 = vunpack.c.l.b16 %v41
  %v90 = vunpack.c.l.b16 %v42
  %v91 = vunpack.c.l.b16 %v43
  %v92 = vunpack.c.l.b16 %v44
  %v93 = vunpack.c.l.b16 %v45
  %v94 = vunpack.c.l.b16 %v46
  %v95 = vunpack.c.l.b16 %v47
  %v96 = vunpack.c.l.b16 %v48
  %v97 = vunpack.c.l.b16 %v49
  %v98 = vpack.c.b16 %v75, %v74
  %v99 = vpack.c.b16 %v77, %v76
  %v100 = vpack.c.b16 %v79, %v78
  %v101 = vpack.c.b16 %v81, %v80
  %v102 = vpack.c.b16 %v83, %v82
  %v103 = vpack.c.b16 %v85, %v84
  %v104 = vpack.c.b16 %v87, %v86
  %v105 = vpack.c.b16 %v89, %v88
  %v106 = vpack.c.b16 %v91, %v90
  %v107 = vpack.c.b16 %v93, %v92
  %v108 = vpack.c.b16 %v95, %v94
  %v109 = vpack.c.b16 %v97, %v96
  %vm122 = vcmask 523264
  %v124 = vsel %vm122, %v24, 0
  %126 = vmatprep.subr.bf16.mxu0 0
  %127 = vmatpush1.bf16.msra.mxu0 %v98
  %128 = vmatprep.subr.bf16.mxu0 0
  %129 = vmatpush1.bf16.msra.mxu0 %v99
  %130 = vmatprep.subr.bf16.mxu0 0
  %131 = vmatpush1.bf16.msra.mxu0 %v100
  %132 = vmatprep.subr.bf16.mxu0 0
  %133 = vmatpush1.bf16.msra.mxu0 %v101
  %134 = vmatprep.subr.bf16.mxu0 0
  %135 = vmatpush1.bf16.msra.mxu0 %v102
  %136 = vmatprep.subr.bf16.mxu0 0
  %137 = vmatpush1.bf16.msra.mxu0 %v103
  %138 = vmatprep.subr.bf16.mxu0 0
  %139 = vmatpush1.bf16.msra.mxu0 %v104
  %140 = vmatprep.subr.bf16.mxu0 0
  %141 = vmatpush1.bf16.msra.mxu0 %v105
  %142 = vmatprep.subr.bf16.mxu0 0
  %143 = vmatpush1.bf16.msra.mxu0 %v106
  %144 = vmatprep.subr.bf16.mxu0 0
  %145 = vmatpush1.bf16.msra.mxu0 %v107
  %146 = vmatprep.subr.bf16.mxu0 0
  %147 = vmatpush1.bf16.msra.mxu0 %v108
  %148 = vmatprep.subr.bf16.mxu0 0
  %149 = vmatpush1.bf16.msra.mxu0 %v109
  %150 = vmatprep.subr.bf16.mxu0 0
  %151 = vmatpush1.bf16.msra.mxu0 0
  %152 = vmatprep.subr.bf16.mxu0 0
  %153 = vmatpush1.bf16.msra.mxu0 0
  %154 = vmatprep.subr.bf16.mxu0 0
  %155 = vmatpush1.bf16.msra.mxu0 0
  %156 = vmatprep.subr.bf16.mxu0 0
  %157 = vmatpush1.bf16.msra.mxu0 0
  %158 = vmatprep.mubr.bf16.mxu0 %v124
  %159 = vmatmul.mubr.bf16.gmra.mrb[0].mxu0 %v23
  %v160 = vpop.f32.mrb[0].mxu0
  %v161 = vadd.f32 0.0, %v160
  %v162 = vpop.f32.mrb[0].mxu0
  %v163 = vpop.f32.mrb[0].mxu0
  %v164 = vpop.f32.mrb[0].mxu0
  %165 = vdwg.mxu0
  %v166 = vadd.f32 %v25, %v161
  %vm167 = vcmask 261120
  %168 = vst.msk [vmem:[#allocation2] sm:$0xff] %vm167, %v166
  // Predicated region
  $region18: #{vit_forward.12} parent=0 // pred_check
    %p169 = pneg %p15
  $region19: #{vit_forward.12} parent=0 // pred_check_branch
    %171 = sbr.rel (%p169) target = $region21
  $region20: #{vit_forward.12} parent=0 // pred_region
    %v172 = vld [vmem:[#allocation2] sm:$0xff]
    %v173 = vld [vmem:[%s2] sm:$0x1]
    %v175 = vlaneseq
    %v176 = vshrl.u32 %v175, 7
    %v177 = vsub.s32 0, %v176
    %v178 = vrot.slane %v173, %v177
    %v180 = vadd.f32 %v172, %v178
    %181 = vst.msk [vmem:[%s3] sm:$0xff] %vm167, %v180
  $region21: #{vit_forward.12} parent=0 // pred_fallthru
    _
  // Predicated region
  $region22: #{vit_forward.12} parent=0 // pred_check
    _
  $region23: #{vit_forward.12} parent=0 // pred_check_branch
    %183 = sbr.rel (0) target = $region25
  $region24: #{vit_forward.12} parent=0 // pred_region
    _
  $region25: #{vit_forward.12} parent=0 // pred_fallthru
    _
  // Predicated region
  $region26: #{vit_forward.12} parent=0 // pred_check
    _
  $region27: #{vit_forward.12} parent=0 // pred_check_branch
    %185 = sbr.rel (0) target = $region29
  $region28: #{vit_forward.12} parent=0 // pred_region
    _
  $region29: #{vit_forward.12} parent=0 // pred_fallthru
    _

// kernel: vit_forward.14
$region0: #{vit_forward.14}
  #allocation0 [shape = 'u32[]', space=smem, size = 0x4, offset = 0x4, fixed_abs, tag = 'smem constant byte address 0x4 - core index']
  #allocation1 [shape = 'u32[144,128]{1,0:T(1,128)}', space=vmem, size = 0x12000, scoped, tag = 'internal scratch']
  %s0 = inlined_call_operand.vmem [shape: bf16[2,6,8,16], index: 0, kind: input, shape index: {}]
  %s1 = inlined_call_operand.vmem [shape: bf16[2,2,8,16], index: 1, kind: output, shape index: {0}]
  %s2 = inlined_call_operand.vmem [shape: f32[2,2,8,8], index: 2, kind: output, shape index: {1}]
  %3 = xla_tuple %s1, %s2
  %s4 = sld [smem:[#allocation0]]
  $region45: #{vit_forward.14} parent=0
    _
  %s6 = ssub.s32 1, %s4
  %s7 = scalar_select 0, %s6, %s4
  loop: start=0, step=1, limit=6
  $region2: #{vit_forward.14} parent=0 // loop_pre_header
    _
  $region3: #{vit_forward.14} parent=0 // loop_header
    %s9 = sphi 0, %s13
    %p10 = scmp.ge.s32.totalorder %s9, 6
    %s16 = sphi 0, %s28
    %s17 = sphi 0, %s24
    %s18 = sphi 0, %s16
    %s19 = sphi 0, %s17
    %s20 = sphi 0, %s18
    %s21 = sphi 0, %s19
    %s33 = sphi 0, %s35
    %s36 = sphi 0, %s33
    %s37 = sphi 0, %s36
    %s53 = sphi 0, %s37
    %s61 = sphi 0, %s63
    %s64 = sphi 0, %s61
    %s65 = sphi 0, %s64
    %s81 = sphi 0, %s65
    %s89 = sphi 0, %s91
    %s92 = sphi 0, %s89
    %s93 = sphi 0, %s92
    %s109 = sphi 0, %s93
  $region4: #{vit_forward.14} parent=0 // loop_header_branch
    %12 = sbr.rel (%p10) target = $region8
  $region5: #{vit_forward.14} parent=0 // loop_body
    %s14 = ssub.s32 %s9, 1
    %s15 = ssub.s32 %s9, 2
    %s22 = sadd.s32 1, %s17
    %p23 = scmp.ge.s32.totalorder %s22, 2
    %s24 = scalar_select %p23, 0, %s22
    %s25 = sadd.s32 1, %s16
    %s26 = scalar_select %p23, %s25, %s16
    %p27 = scmp.ge.s32.totalorder %s26, 2
    %s28 = scalar_select %p27, 0, %s26
    %s29 = ssub.s32 %s16, %s28
    %s30 = ssub.s32 %s17, %s24
    %s31 = sor.u32 %s29, %s30
    %p32 = scmp.eq.s32.totalorder %s31, 0
    %s34 = sadd.s32 %s33, 1
    %s35 = scalar_select %p32, %s33, %s34
    %p38 = pneg %p32
    %p39 = scmp.eq.s32.totalorder %s9, 3
    %p40 = por %p38, %p39
    %p41 = scmp.ne.s32.totalorder %s33, %s36
    %p42 = scmp.eq.s32.totalorder %s9, 0
    %p43 = por %p41, %p42
    %p44 = scmp.ne.s32.totalorder %s33, %s36
    %p45 = scmp.eq.s32.totalorder %s14, 3
    %p46 = por %p44, %p45
    %p47 = scmp.ne.s32.totalorder %s36, %s37
    %p48 = scmp.eq.s32.totalorder %s14, 0
    %p49 = por %p47, %p48
    %p50 = scmp.ne.s32.totalorder %s36, %s37
    %p51 = scmp.eq.s32.totalorder %s15, 3
    %p52 = por %p50, %p51
    %p54 = scmp.ne.s32.totalorder %s37, %s53
    %p55 = scmp.eq.s32.totalorder %s15, 0
    %p56 = por %p54, %p55
    %s57 = ssub.s32 %s16, %s28
    %s58 = ssub.s32 %s17, %s24
    %s59 = sor.u32 %s57, %s58
    %p60 = scmp.eq.s32.totalorder %s59, 0
    %s62 = sadd.s32 %s61, 1
    %s63 = scalar_select %p60, %s61, %s62
    %p66 = pneg %p60
    %p67 = scmp.eq.s32.totalorder %s9, 3
    %p68 = por %p66, %p67
    %p69 = scmp.ne.s32.totalorder %s61, %s64
    %p70 = scmp.eq.s32.totalorder %s9, 0
    %p71 = por %p69, %p70
    %p72 = scmp.ne.s32.totalorder %s61, %s64
    %p73 = scmp.eq.s32.totalorder %s14, 3
    %p74 = por %p72, %p73
    %p75 = scmp.ne.s32.totalorder %s64, %s65
    %p76 = scmp.eq.s32.totalorder %s14, 0
    %p77 = por %p75, %p76
    %p78 = scmp.ne.s32.totalorder %s64, %s65
    %p79 = scmp.eq.s32.totalorder %s15, 3
    %p80 = por %p78, %p79
    %p82 = scmp.ne.s32.totalorder %s65, %s81
    %p83 = scmp.eq.s32.totalorder %s15, 0
    %p84 = por %p82, %p83
    %s85 = ssub.s32 %s16, %s28
    %s86 = ssub.s32 %s17, %s24
    %s87 = sor.u32 %s85, %s86
    %p88 = scmp.eq.s32.totalorder %s87, 0
    %s90 = sadd.s32 %s89, 1
    %s91 = scalar_select %p88, %s89, %s90
    %p94 = pneg %p88
    %p95 = scmp.eq.s32.totalorder %s9, 3
    %p96 = por %p94, %p95
    %p97 = scmp.ne.s32.totalorder %s89, %s92
    %p98 = scmp.eq.s32.totalorder %s9, 0
    %p99 = por %p97, %p98
    %p100 = scmp.ne.s32.totalorder %s89, %s92
    %p101 = scmp.eq.s32.totalorder %s14, 3
    %p102 = por %p100, %p101
    %p103 = scmp.ne.s32.totalorder %s92, %s93
    %p104 = scmp.eq.s32.totalorder %s14, 0
    %p105 = por %p103, %p104
    %p106 = scmp.ne.s32.totalorder %s92, %s93
    %p107 = scmp.eq.s32.totalorder %s15, 3
    %p108 = por %p106, %p107
    %p110 = scmp.ne.s32.totalorder %s93, %s109
    %p111 = scmp.eq.s32.totalorder %s15, 0
    %p112 = por %p110, %p111
    %p113 = scmp.le.s32.totalorder 1, %s9
    %p114 = scmp.lt.s32.totalorder %s9, 5
    %p115 = pnand %p113, %p114
    %p116 = pneg %p115
    // Predicated region
    $region9: #{vit_forward.14} parent=5 // pred_check
      _
    $region10: #{vit_forward.14} parent=5 // pred_check_branch
      %118 = sbr.rel (%p115) target = $region12
    $region11: #{vit_forward.14} parent=5 // pred_region
      %s119 = ssub.s32 %s9, 1
    $region12: #{vit_forward.14} parent=5 // pred_fallthru
      _
    %p120 = scmp.lt.s32.totalorder %s9, 4
    // Predicated region
    $region13: #{vit_forward.14} parent=5 // pred_check
      %p121 = pneg %p120
    $region14: #{vit_forward.14} parent=5 // pred_check_branch
      %123 = sbr.rel (%p121) target = $region16
    $region15: #{vit_forward.14} parent=5 // pred_region
      // Predicated region
      $region17: #{vit_forward.14} parent=15 // pred_check
        %p124 = pneg %p43
      $region18: #{vit_forward.14} parent=15 // pred_check_branch
        %126 = sbr.rel (%p124) target = $region20
      $region19: #{vit_forward.14} parent=15 // pred_region
        %s127 = smul.u32 3, %s17
        %p128 = scmp.lt.s32.totalorder %s16, 1
        %s129 = scalar_select %p128, %s16, 1
        %p130 = scmp.lt.s32.totalorder %s127, 5
        %s131 = scalar_select %p130, %s127, 5
        %s132 = smul.addr %s129, 6
        %s133 = sadd.s32 %s131, %s132
        %s134 = smul.addr %s133, 4
        %s135 = scalar_lea.vmem %s0, %s134
        %s136 = smul.u32 3, %s17
      $region20: #{vit_forward.14} parent=15 // pred_fallthru
        _
    $region16: #{vit_forward.14} parent=5 // pred_fallthru
      _
    %p137 = scmp.le.s32.totalorder 1, %s9
    %p138 = scmp.lt.s32.totalorder %s9, 5
    %p139 = pnand %p137, %p138
    %p140 = pneg %p139
    // Predicated region
    $region21: #{vit_forward.14} parent=5 // pred_check
      _
    $region22: #{vit_forward.14} parent=5 // pred_check_branch
      %142 = sbr.rel (%p139) target = $region24
    $region23: #{vit_forward.14} parent=5 // pred_region
      %s143 = ssub.s32 %s9, 1
      %s144 = smul.u32 3, %s19
      %p145 = scmp.lt.s32.totalorder %s18, 1
      %s146 = scalar_select %p145, %s18, 1
      %p147 = scmp.lt.s32.totalorder %s144, 5
      %s148 = scalar_select %p147, %s144, 5
      %s149 = smul.addr %s146, 6
      %s150 = sadd.s32 %s148, %s149
      %s151 = smul.addr %s150, 4
      %s152 = scalar_lea.vmem %s0, %s151
      %p153 = pneg %p49
      %p154 = pneg %p46
      %p155 = pneg %p77
      %p156 = pneg %p74
      %p157 = scmp.lt.s32.totalorder %s18, 1
      %s158 = scalar_select %p157, %s18, 1
      %p159 = scmp.lt.s32.totalorder %s19, 1
      %s160 = scalar_select %p159, %s19, 1
      %s161 = smul.addr %s158, 2
      %s162 = sadd.s32 %s160, %s161
      %s163 = smul.addr %s162, 4
      %s164 = scalar_lea.vmem %s1, %s163
      %p165 = pneg %p105
      %p166 = pneg %p102
      %p167 = scmp.lt.s32.totalorder %s18, 1
      %s168 = scalar_select %p167, %s18, 1
      %p169 = scmp.lt.s32.totalorder %s19, 1
      %s170 = scalar_select %p169, %s19, 1
      %s171 = smul.addr %s168, 2
      %s172 = sadd.s32 %s170, %s171
      %s173 = smul.addr %s172, 8
      %s174 = scalar_lea.vmem %s2, %s173
      %s175 = smul.u32 3, %s19
      %p176 = scmp.lt.s32.totalorder %s18, 1
      %s177 = scalar_select %p176, %s18, 1
      %p178 = scmp.lt.s32.totalorder %s175, 5
      %s179 = scalar_select %p178, %s175, 5
      %s180 = smul.addr %s177, 6
      %s181 = sadd.s32 %s179, %s180
      %s182 = smul.addr %s181, 4
      %s183 = scalar_lea.vmem %s0, %s182
      %s184 = smul.u32 3, %s19
      %p185 = scmp.lt.s32.totalorder %s18, 1
      %s186 = scalar_select %p185, %s18, 1
      %p187 = scmp.lt.s32.totalorder %s19, 1
      %s188 = scalar_select %p187, %s19, 1
      %s189 = smul.addr %s186, 2
      %s190 = sadd.s32 %s188, %s189
      %s191 = smul.addr %s190, 4
      %s192 = scalar_lea.vmem %s1, %s191
      %p193 = scmp.lt.s32.totalorder %s18, 1
      %s194 = scalar_select %p193, %s18, 1
      %p195 = scmp.lt.s32.totalorder %s19, 1
      %s196 = scalar_select %p195, %s19, 1
      %s197 = smul.addr %s194, 2
      %s198 = sadd.s32 %s196, %s197
      %s199 = smul.addr %s198, 8
      %s200 = scalar_lea.vmem %s2, %s199
      %v202 = vld [vmem:[%s183] sm:$0xf]
      %s203 = scalar_lea.vmem %s183, 4
      %v204 = vld [vmem:[%s203] sm:$0xf]
      %s205 = scalar_lea.vmem %s183, 8
      %v206 = vld [vmem:[%s205] sm:$0xf]
      %vm207 = vcmask 130048
      %v209 = vsel %vm207, %v202, 0
      %v212 = vsel %vm207, %v204, 0
      %214 = vmatprep.subr.bf16.mxu0 0
      %215 = vmatpush1.bf16.xpose.msra.mxu0 %v212
      %216 = vmatprep.subr.bf16.mxu0 0
      %217 = vmatpush1.bf16.xpose.msra.mxu0 0
      %218 = vmatprep.subr.bf16.mxu0 0
      %219 = vmatpush1.bf16.xpose.msra.mxu0 0
      %220 = vmatprep.subr.bf16.mxu0 0
      %221 = vmatpush1.bf16.xpose.msra.mxu0 0
      %222 = vmatprep.subr.bf16.mxu0 0
      %223 = vmatpush1.bf16.xpose.msra.mxu0 0
      %224 = vmatprep.subr.bf16.mxu0 0
      %225 = vmatpush1.bf16.xpose.msra.mxu0 0
      %226 = vmatprep.subr.bf16.mxu0 0
      %227 = vmatpush1.bf16.xpose.msra.mxu0 0
      %228 = vmatprep.subr.bf16.mxu0 0
      %229 = vmatpush1.bf16.xpose.msra.mxu0 0
      %230 = vmatprep.subr.bf16.mxu0 0
      %231 = vmatpush1.bf16.xpose.msra.mxu0 0
      %232 = vmatprep.subr.bf16.mxu0 0
      %233 = vmatpush1.bf16.xpose.msra.mxu0 0
      %234 = vmatprep.subr.bf16.mxu0 0
      %235 = vmatpush1.bf16.xpose.msra.mxu0 0
      %236 = vmatprep.subr.bf16.mxu0 0
      %237 = vmatpush1.bf16.xpose.msra.mxu0 0
      %238 = vmatprep.subr.bf16.mxu0 0
      %239 = vmatpush1.bf16.xpose.msra.mxu0 0
      %240 = vmatprep.subr.bf16.mxu0 0
      %241 = vmatpush1.bf16.xpose.msra.mxu0 0
      %242 = vmatprep.subr.bf16.mxu0 0
      %243 = vmatpush1.bf16.xpose.msra.mxu0 0
      %244 = vmatprep.subr.bf16.mxu0 0
      %245 = vmatpush1.bf16.xpose.msra.mxu0 0
      %246 = vmatprep.mubr.bf16.mxu0 0
      %247 = vmatmul.mubr.bf16.gmra.mrb[0].mxu0 %v209
      %v248 = vpop.f32.mrb[0].mxu0
      %v249 = vadd.f32 0.0, %v248
      %v250 = vpop.f32.mrb[0].mxu0
      %v251 = vpop.f32.mrb[0].mxu0
      %v252 = vpop.f32.mrb[0].mxu0
      %253 = vdwg.mxu0
      %v254 = vmul.f32 %v249, 0.25
      %v255 = vlaneseq
      %v256 = vand.u32 %v255, 127
      %vm257 = vcmp.lt.s32.totalorder %v256, 5
      %v258 = vsel %vm257, %v254, -1e+30
      %vm259 = vcmask 64512
      %v260 = vsel %vm259, %v258, -inf
      %261 = vmax.xlane.f32.xlu0 %v260
      %v262 = vpop.xlane.xlu0 %261
      %v263 = vsub.f32 %v258, %v262
      %v264 = vmul.f32 %v263, 1.442695
      %v265 = vpow.pop %v264
      %v266 = vsel %vm259, %v265, 0.0
      %267 = vadd.xlane.f32.xlu0 %v266
      %v268 = vpop.xlane.xlu0 %267
      %v269 = vrcp.pop %v268
      %v270 = vmul.f32 1.0, %v269
      %v271 = vmul.f32 %v265, %v270
      %272 = vst.msk [vmem:[%s200] sm:$0xff] %vm259, %v271
      %v273 = vpack.c.bf16 %v271, %v271
      %v275 = vsel %vm259, %v273, 0
      %vm277 = vcmask 1043456
      %v279 = vsel %vm277, %v206, 0
      %281 = vmatprep.subr.bf16.mxu0 0
      %282 = vmatpush1.bf16.msra.mxu0 %v279
      %283 = vmatprep.subr.bf16.mxu0 0
      %284 = vmatpush1.bf16.msra.mxu0 0
      %285 = vmatprep.subr.bf16.mxu0 0
      %286 = vmatpush1.bf16.msra.mxu0 0
      %287 = vmatprep.subr.bf16.mxu0 0
      %288 = vmatpush1.bf16.msra.mxu0 0
      %289 = vmatprep.subr.bf16.mxu0 0
      %290 = vmatpush1.bf16.msra.mxu0 0
      %291 = vmatprep.subr.bf16.mxu0 0
      %292 = vmatpush1.bf16.msra.mxu0 0
      %293 = vmatprep.subr.bf16.mxu0 0
      %294 = vmatpush1.bf16.msra.mxu0 0
      %295 = vmatprep.subr.bf16.mxu0 0
      %296 = vmatpush1.bf16.msra.mxu0 0
      %297 = vmatprep.subr.bf16.mxu0 0
      %298 = vmatpush1.bf16.msra.mxu0 0
      %299 = vmatprep.subr.bf16.mxu0 0
      %300 = vmatpush1.bf16.msra.mxu0 0
      %301 = vmatprep.subr.bf16.mxu0 0
      %302 = vmatpush1.bf16.msra.mxu0 0
      %303 = vmatprep.subr.bf16.mxu0 0
      %304 = vmatpush1.bf16.msra.mxu0 0
      %305 = vmatprep.subr.bf16.mxu0 0
      %306 = vmatpush1.bf16.msra.mxu0 0
      %307 = vmatprep.subr.bf16.mxu0 0
      %308 = vmatpush1.bf16.msra.mxu0 0
      %309 = vmatprep.subr.bf16.mxu0 0
      %310 = vmatpush1.bf16.msra.mxu0 0
      %311 = vmatprep.subr.bf16.mxu0 0
      %312 = vmatpush1.bf16.msra.mxu0 0
      %313 = vmatprep.mubr.bf16.mxu0 0
      %314 = vmatmul.mubr.bf16.gmra.mrb[0].mxu0 %v275
      %v315 = vpop.f32.mrb[0].mxu0
      %v316 = vadd.f32 0.0, %v315
      %v317 = vpop.f32.mrb[0].mxu0
      %v318 = vpop.f32.mrb[0].mxu0
      %v319 = vpop.f32.mrb[0].mxu0
      %320 = vdwg.mxu0
      %v321 = vpack.c.bf16 %v316, %v316
      %vm322 = vcmask 125952
      %323 = vst.msk [vmem:[%s192] sm:$0xf] %vm322, %v321
      %p324 = scmp.lt.s32.totalorder %s18, 1
      %s325 = scalar_select %p324, %s18, 1
      %p326 = scmp.lt.s32.totalorder %s19, 1
      %s327 = scalar_select %p326, %s19, 1
      %s328 = smul.addr %s325, 2
      %s329 = sadd.s32 %s327, %s328
      %s330 = smul.addr %s329, 4
      %s331 = scalar_lea.vmem %s1, %s330
      %p332 = scmp.lt.s32.totalorder %s18, 1
      %s333 = scalar_select %p332, %s18, 1
      %p334 = scmp.lt.s32.totalorder %s19, 1
      %s335 = scalar_select %p334, %s19, 1
      %s336 = smul.addr %s333, 2
      %s337 = sadd.s32 %s335, %s336
      %s338 = smul.addr %s337, 8
      %s339 = scalar_lea.vmem %s2, %s338
      // Predicated region
      $region25: #{vit_forward.14} parent=23 // pred_check
        %p340 = pneg %p74
      $region26: #{vit_forward.14} parent=23 // pred_check_branch
        %342 = sbr.rel (%p340) target = $region28
      $region27: #{vit_forward.14} parent=23 // pred_region
        _
      $region28: #{vit_forward.14} parent=23 // pred_fallthru
        _
      // Predicated region
      $region29: #{vit_forward.14} parent=23 // pred_check
        %p343 = pneg %p102
      $region30: #{vit_forward.14} parent=23 // pred_check_branch
        %345 = sbr.rel (%p343) target = $region32
      $region31: #{vit_forward.14} parent=23 // pred_region
        _
      $region32: #{vit_forward.14} parent=23 // pred_fallthru
        _
    $region24: #{vit_forward.14} parent=5 // pred_fallthru
      _
    %p346 = scmp.le.s32.totalorder 2, %s9
    // Predicated region
    $region33: #{vit_forward.14} parent=5 // pred_check
      %p347 = pneg %p346
    $region34: #{vit_forward.14} parent=5 // pred_check_branch
      %349 = sbr.rel (%p347) target = $region36
    $region35: #{vit_forward.14} parent=5 // pred_region
      %s350 = ssub.s32 %s9, 2
      // Predicated region
      $region37: #{vit_forward.14} parent=35 // pred_check
        %p351 = pneg %p80
      $region38: #{vit_forward.14} parent=35 // pred_check_branch
        %353 = sbr.rel (%p351) target = $region40
      $region39: #{vit_forward.14} parent=35 // pred_region
        %p354 = scmp.lt.s32.totalorder %s20, 1
        %s355 = scalar_select %p354, %s20, 1
        %p356 = scmp.lt.s32.totalorder %s21, 1
        %s357 = scalar_select %p356, %s21, 1
        %s358 = smul.addr %s355, 2
        %s359 = sadd.s32 %s357, %s358
        %s360 = smul.addr %s359, 4
        %s361 = scalar_lea.vmem %s1, %s360
      $region40: #{vit_forward.14} parent=35 // pred_fallthru
        _
      // Predicated region
      $region41: #{vit_forward.14} parent=35 // pred_check
        %p362 = pneg %p108
      $region42: #{vit_forward.14} parent=35 // pred_check_branch
        %364 = sbr.rel (%p362) target = $region44
      $region43: #{vit_forward.14} parent=35 // pred_region
        %p365 = scmp.lt.s32.totalorder %s20, 1
        %s366 = scalar_select %p365, %s20, 1
        %p367 = scmp.lt.s32.totalorder %s21, 1
        %s368 = scalar_select %p367, %s21, 1
        %s369 = smul.addr %s366, 2
        %s370 = sadd.s32 %s368, %s369
        %s371 = smul.addr %s370, 8
        %s372 = scalar_lea.vmem %s2, %s371
      $region44: #{vit_forward.14} parent=35 // pred_fallthru
        _
    $region36: #{vit_forward.14} parent=5 // pred_fallthru
      _
  $region6: #{vit_forward.14} parent=0 // loop_footer
    %s13 = sadd.s32 1, %s9
  $region7: #{vit_forward.14} parent=0 // loop_footer_branch
    %8 = sbr.rel target = $region3
  $region8: #{vit_forward.14} parent=0 // loop_exit
    _

// kernel: vit_forward.13
$region0: #{vit_forward.13}
  #allocation0 [shape = 'u32[]', space=smem, size = 0x4, offset = 0x4, fixed_abs, tag = 'smem constant byte address 0x4 - core index']
  #allocation1 [shape = 'u32[144,128]{1,0:T(1,128)}', space=vmem, size = 0x12000, scoped, tag = 'internal scratch']
  #allocation2 [shape = 'f32[16,96]{1,0:T(8,128)}', space=vmem, size = 0x2000, scoped, tag = 'scratch operand']
  #allocation3 [shape = 'bf16[16,32]{1,0:T(16,128)(2,1)}', space=vmem, size = 0x1000, scoped, tag = 'scratch operand']
  %s0 = inlined_call_operand.vmem [shape: f32[16,32], index: 0, kind: input, shape index: {}]
  %s1 = inlined_call_operand.vmem [shape: bf16[32,96], index: 1, kind: input, shape index: {}]
  %s2 = inlined_call_operand.vmem [shape: f32[1,96], index: 2, kind: input, shape index: {}]
  %s3 = inlined_call_operand.vmem [shape: f32[1,32], index: 3, kind: input, shape index: {}]
  %s4 = inlined_call_operand.vmem [shape: f32[1,32], index: 4, kind: input, shape index: {}]
  %s5 = inlined_call_operand.vmem [shape: bf16[16,96], index: 5, kind: output, shape index: {}]
  %s6 = sld [smem:[#allocation0]]
  $region42: #{vit_forward.13} parent=0
    _
  %s8 = ssub.s32 1, %s6
  %s9 = scalar_select 0, %s8, %s6
  // Predicated region
  $region2: #{vit_forward.13} parent=0 // pred_check
    _
  $region3: #{vit_forward.13} parent=0 // pred_check_branch
    %11 = sbr.rel (0) target = $region5
  $region4: #{vit_forward.13} parent=0 // pred_region
    _
  $region5: #{vit_forward.13} parent=0 // pred_fallthru
    _
  // Predicated region
  $region6: #{vit_forward.13} parent=0 // pred_check
    _
  $region7: #{vit_forward.13} parent=0 // pred_check_branch
    %13 = sbr.rel (0) target = $region9
  $region8: #{vit_forward.13} parent=0 // pred_region
    _
  $region9: #{vit_forward.13} parent=0 // pred_fallthru
    _
  // Predicated region
  $region10: #{vit_forward.13} parent=0 // pred_check
    _
  $region11: #{vit_forward.13} parent=0 // pred_check_branch
    %15 = sbr.rel (0) target = $region13
  $region12: #{vit_forward.13} parent=0 // pred_region
    _
  $region13: #{vit_forward.13} parent=0 // pred_fallthru
    _
  // Predicated region
  $region14: #{vit_forward.13} parent=0 // pred_check
    _
  $region15: #{vit_forward.13} parent=0 // pred_check_branch
    %17 = sbr.rel (0) target = $region17
  $region16: #{vit_forward.13} parent=0 // pred_region
    _
  $region17: #{vit_forward.13} parent=0 // pred_fallthru
    _
  // Predicated region
  $region18: #{vit_forward.13} parent=0 // pred_check
    _
  $region19: #{vit_forward.13} parent=0 // pred_check_branch
    %19 = sbr.rel (0) target = $region21
  $region20: #{vit_forward.13} parent=0 // pred_region
    _
  $region21: #{vit_forward.13} parent=0 // pred_fallthru
    _
  %p21 = scmp.eq.s32.totalorder 0, 0
  // Predicated region
  $region22: #{vit_forward.13} parent=0 // pred_check
    %p22 = pneg %p21
  $region23: #{vit_forward.13} parent=0 // pred_check_branch
    %24 = sbr.rel (%p22) target = $region25
  $region24: #{vit_forward.13} parent=0 // pred_region
    %vm25 = vcmask 785408
    %26 = vst.msk [vmem:[#allocation2] sm:$0xff] %vm25, 0.0
    %27 = vst.msk [vmem:[#allocation2 + $0x8] sm:$0xff] %vm25, 0.0
  $region25: #{vit_forward.13} parent=0 // pred_fallthru
    _
  %p28 = scmp.eq.s32.totalorder 0, 0
  // Predicated region
  $region26: #{vit_forward.13} parent=0 // pred_check
    %p29 = pneg %p28
  $region27: #{vit_forward.13} parent=0 // pred_check_branch
    %31 = sbr.rel (%p29) target = $region29
  $region28: #{vit_forward.13} parent=0 // pred_region
    %v32 = vld [vmem:[%s0] sm:$0xff]
    %v33 = vld [vmem:[%s0 + $0x8] sm:$0xff]
    %vm34 = vcmask 261120
    %v35 = vsel %vm34, %v32, 0.0
    %36 = vadd.xlane.f32.xlu0 %v35
    %v37 = vpop.xlane.xlu0 %36
    %v38 = vsel %vm34, %v33, 0.0
    %39 = vadd.xlane.f32.xlu0 %v38
    %v40 = vpop.xlane.xlu0 %39
    %v41 = vrcp.pop 32.0
    %v42 = vmul.f32 %v37, %v41
    %v43 = vmul.f32 %v40, %v41
    %v44 = vsub.f32 %v32, %v42
    %v45 = vsub.f32 %v33, %v43
    %v46 = vmul.f32 %v44, %v44
    %v47 = vmul.f32 %v45, %v45
    %v48 = vsel %vm34, %v46, 0.0
    %49 = vadd.xlane.f32.xlu0 %v48
    %v50 = vpop.xlane.xlu0 %49
    %v51 = vsel %vm34, %v47, 0.0
    %52 = vadd.xlane.f32.xlu0 %v51
    %v53 = vpop.xlane.xlu0 %52
    %v54 = vmul.f32 %v50, %v41
    %v55 = vmul.f32 %v53, %v41
    %v56 = vadd.f32 %v54, 1e-12
    %v57 = vadd.f32 %v55, 1e-12
    %v58 = vrsqrt.pop %v56
    %v59 = vrsqrt.pop %v57
    %v60 = vmul.f32 %v44, %v58
    %v61 = vmul.f32 %v45, %v59
    %v62 = vld [vmem:[%s3] sm:$0x1]
    %v64 = vlaneseq
    %v65 = vshrl.u32 %v64, 7
    %v66 = vsub.s32 0, %v65
    %v67 = vrot.slane %v62, %v66
    %v69 = vmul.f32 %v60, %v67
    %v70 = vmul.f32 %v61, %v67
    %v71 = vld [vmem:[%s4] sm:$0x1]
    %v73 = vlaneseq
    %v74 = vshrl.u32 %v73, 7
    %v75 = vsub.s32 0, %v74
    %v76 = vrot.slane %v71, %v75
    %v78 = vadd.f32 %v69, %v76
    %v79 = vadd.f32 %v70, %v76
    %v80 = vpack.c.bf16 %v79, %v78
    %81 = vst.msk [vmem:[#allocation3] sm:$0xff] %vm34, %v80
  $region29: #{vit_forward.13} parent=0 // pred_fallthru
    _
  %v82 = vld [vmem:[#allocation3] sm:$0xff]
  %v83 = vld [vmem:[#allocation2] sm:$0xff]
  %v84 = vld [vmem:[#allocation2 + $0x8] sm:$0xff]
  %v85 = vld [vmem:[%s1] sm:$0xf]
  %v86 = vld [vmem:[%s1 + $0x4] sm:$0xf]
  %v87 = vld [vmem:[%s1 + $0x8] sm:$0xf]
  %v88 = vld [vmem:[%s1 + $0xc] sm:$0xf]
  %v93 = vunpack.c.l.b16 %v85
  %v94 = vunpack.c.l.b16 %v86
  %v95 = vunpack.c.l.b16 %v87
  %v96 = vunpack.c.l.b16 %v88
  %v97 = vpack.c.b16 %v94, %v93
  %v98 = vpack.c.b16 %v96, %v95
  %vm101 = vcmask 261120
  %v103 = vsel %vm101, %v82, 0
  %105 = vmatprep.subr.bf16.mxu0 0
  %106 = vmatpush1.bf16.msra.mxu0 %v97
  %107 = vmatprep.subr.bf16.mxu0 0
  %108 = vmatpush1.bf16.msra.mxu0 %v98
  %109 = vmatprep.subr.bf16.mxu0 0
  %110 = vmatpush1.bf16.msra.mxu0 0
  %111 = vmatprep.subr.bf16.mxu0 0
  %112 = vmatpush1.bf16.msra.mxu0 0
  %113 = vmatprep.subr.bf16.mxu0 0
  %114 = vmatpush1.bf16.msra.mxu0 0
  %115 = vmatprep.subr.bf16.mxu0 0
  %116 = vmatpush1.bf16.msra.mxu0 0
  %117 = vmatprep.subr.bf16.mxu0 0
  %118 = vmatpush1.bf16.msra.mxu0 0
  %119 = vmatprep.subr.bf16.mxu0 0
  %120 = vmatpush1.bf16.msra.mxu0 0
  %121 = vmatprep.subr.bf16.mxu0 0
  %122 = vmatpush1.bf16.msra.mxu0 0
  %123 = vmatprep.subr.bf16.mxu0 0
  %124 = vmatpush1.bf16.msra.mxu0 0
  %125 = vmatprep.subr.bf16.mxu0 0
  %126 = vmatpush1.bf16.msra.mxu0 0
  %127 = vmatprep.subr.bf16.mxu0 0
  %128 = vmatpush1.bf16.msra.mxu0 0
  %129 = vmatprep.subr.bf16.mxu0 0
  %130 = vmatpush1.bf16.msra.mxu0 0
  %131 = vmatprep.subr.bf16.mxu0 0
  %132 = vmatpush1.bf16.msra.mxu0 0
  %133 = vmatprep.subr.bf16.mxu0 0
  %134 = vmatpush1.bf16.msra.mxu0 0
  %135 = vmatprep.subr.bf16.mxu0 0
  %136 = vmatpush1.bf16.msra.mxu0 0
  %137 = vmatprep.mubr.bf16.mxu0 0
  %138 = vmatmul.mubr.bf16.gmra.mrb[0].mxu0 %v103
  %v139 = vpop.f32.mrb[0].mxu0
  %v140 = vadd.f32 0.0, %v139
  %v141 = vpop.f32.mrb[0].mxu0
  %v142 = vpop.f32.mrb[0].mxu0
  %v143 = vadd.f32 0.0, %v142
  %v144 = vpop.f32.mrb[0].mxu0
  %145 = vdwg.mxu0
  %v146 = vadd.f32 %v83, %v140
  %v147 = vadd.f32 %v84, %v143
  %vm148 = vcmask 785408
  %149 = vst.msk [vmem:[#allocation2] sm:$0xff] %vm148, %v146
  %150 = vst.msk [vmem:[#allocation2 + $0x8] sm:$0xff] %vm148, %v147
  // Predicated region
  $region30: #{vit_forward.13} parent=0 // pred_check
    %p151 = pneg %p21
  $region31: #{vit_forward.13} parent=0 // pred_check_branch
    %153 = sbr.rel (%p151) target = $region33
  $region32: #{vit_forward.13} parent=0 // pred_region
    %v154 = vld [vmem:[#allocation2] sm:$0xff]
    %v155 = vld [vmem:[#allocation2 + $0x8] sm:$0xff]
    %v156 = vld [vmem:[%s2] sm:$0x1]
    %v158 = vlaneseq
    %v159 = vshrl.u32 %v158, 7
    %v160 = vsub.s32 0, %v159
    %v161 = vrot.slane %v156, %v160
    %v163 = vadd.f32 %v154, %v161
    %v164 = vadd.f32 %v155, %v161
    %v165 = vpack.c.bf16 %v164, %v163
    %v167 = vunpack.c.l.b16 %v165
    %v168 = vunpack.c.h.b16 %v165
    %v169 = vpack.c.b16 %v167, %v167
    %v170 = vpack.c.b16 %v168, %v168
    %vm173 = vcmask 781312
    %174 = vst.msk [vmem:[%s5] sm:$0xf] %vm173, %v169
    %175 = vst.msk [vmem:[%s5 + $0x4] sm:$0xf] %vm173, %v170
  $region33: #{vit_forward.13} parent=0 // pred_fallthru
    _
  // Predicated region
  $region34: #{vit_forward.13} parent=0 // pred_check
    _
  $region35: #{vit_forward.13} parent=0 // pred_check_branch
    %177 = sbr.rel (0) target = $region37
  $region36: #{vit_forward.13} parent=0 // pred_region
    _
  $region37: #{vit_forward.13} parent=0 // pred_fallthru
    _
  // Predicated region
  $region38: #{vit_forward.13} parent=0 // pred_check
    _
  $region39: #{vit_forward.13} parent=0 // pred_check_branch
    %179 = sbr.rel (0) target = $region41
  $region40: #{vit_forward.13} parent=0 // pred_region
    _
  $region41: #{vit_forward.13} parent=0 // pred_fallthru
    _

// kernel: vit_forward.15
$region0: #{vit_forward.15}
  #allocation0 [shape = 'u32[]', space=smem, size = 0x4, offset = 0x4, fixed_abs, tag = 'smem constant byte address 0x4 - core index']
  #allocation1 [shape = 'u32[144,128]{1,0:T(1,128)}', space=vmem, size = 0x12000, scoped, tag = 'internal scratch']
  #allocation2 [shape = 'f32[16,32]{1,0:T(8,128)}', space=vmem, size = 0x2000, scoped, tag = 'scratch operand']
  %s0 = inlined_call_operand.vmem [shape: bf16[16,32], index: 0, kind: input, shape index: {}]
  %s1 = inlined_call_operand.vmem [shape: bf16[32,32], index: 1, kind: input, shape index: {}]
  %s2 = inlined_call_operand.vmem [shape: f32[1,32], index: 2, kind: input, shape index: {}]
  %s3 = inlined_call_operand.vmem [shape: f32[16,32], index: 3, kind: input, shape index: {}]
  %s4 = inlined_call_operand.vmem [shape: f32[16,32], index: 4, kind: output, shape index: {}]
  %s5 = sld [smem:[#allocation0]]
  $region34: #{vit_forward.15} parent=0
    _
  %s7 = ssub.s32 1, %s5
  %s8 = scalar_select 0, %s7, %s5
  // Predicated region
  $region2: #{vit_forward.15} parent=0 // pred_check
    _
  $region3: #{vit_forward.15} parent=0 // pred_check_branch
    %10 = sbr.rel (0) target = $region5
  $region4: #{vit_forward.15} parent=0 // pred_region
    _
  $region5: #{vit_forward.15} parent=0 // pred_fallthru
    _
  // Predicated region
  $region6: #{vit_forward.15} parent=0 // pred_check
    _
  $region7: #{vit_forward.15} parent=0 // pred_check_branch
    %12 = sbr.rel (0) target = $region9
  $region8: #{vit_forward.15} parent=0 // pred_region
    _
  $region9: #{vit_forward.15} parent=0 // pred_fallthru
    _
  // Predicated region
  $region10: #{vit_forward.15} parent=0 // pred_check
    _
  $region11: #{vit_forward.15} parent=0 // pred_check_branch
    %14 = sbr.rel (0) target = $region13
  $region12: #{vit_forward.15} parent=0 // pred_region
    _
  $region13: #{vit_forward.15} parent=0 // pred_fallthru
    _
  // Predicated region
  $region14: #{vit_forward.15} parent=0 // pred_check
    _
  $region15: #{vit_forward.15} parent=0 // pred_check_branch
    %16 = sbr.rel (0) target = $region17
  $region16: #{vit_forward.15} parent=0 // pred_region
    _
  $region17: #{vit_forward.15} parent=0 // pred_fallthru
    _
  %p18 = scmp.eq.s32.totalorder 0, 0
  // Predicated region
  $region18: #{vit_forward.15} parent=0 // pred_check
    %p19 = pneg %p18
  $region19: #{vit_forward.15} parent=0 // pred_check_branch
    %21 = sbr.rel (%p19) target = $region21
  $region20: #{vit_forward.15} parent=0 // pred_region
    %vm22 = vcmask 261120
    %23 = vst.msk [vmem:[#allocation2] sm:$0xff] %vm22, 0.0
    %24 = vst.msk [vmem:[#allocation2 + $0x8] sm:$0xff] %vm22, 0.0
  $region21: #{vit_forward.15} parent=0 // pred_fallthru
    _
  %v25 = vld [vmem:[%s0] sm:$0xf]
  %v26 = vld [vmem:[%s0 + $0x4] sm:$0xf]
  %v27 = vld [vmem:[#allocation2] sm:$0xff]
  %v28 = vld [vmem:[#allocation2 + $0x8] sm:$0xff]
  %v29 = vld [vmem:[%s1] sm:$0xf]
  %v30 = vld [vmem:[%s1 + $0x4] sm:$0xf]
  %v31 = vld [vmem:[%s1 + $0x8] sm:$0xf]
  %v32 = vld [vmem:[%s1 + $0xc] sm:$0xf]
  %v35 = vunpack.c.l.b16 %v25
  %v36 = vunpack.c.l.b16 %v26
  %v37 = vpack.c.b16 %v36, %v35
  %v42 = vunpack.c.l.b16 %v29
  %v43 = vunpack.c.l.b16 %v30
  %v44 = vunpack.c.l.b16 %v31
  %v45 = vunpack.c.l.b16 %v32
  %v46 = vpack.c.b16 %v43, %v42
  %v47 = vpack.c.b16 %v45, %v44
  %vm50 = vcmask 261120
  %v52 = vsel %vm50, %v37, 0
  %54 = vmatprep.subr.bf16.mxu0 0
  %55 = vmatpush1.bf16.msra.mxu0 %v46
  %56 = vmatprep.subr.bf16.mxu0 0
  %57 = vmatpush1.bf16.msra.mxu0 %v47
  %58 = vmatprep.subr.bf16.mxu0 0
  %59 = vmatpush1.bf16.msra.mxu0 0
  %60 = vmatprep.subr.bf16.mxu0 0
  %61 = vmatpush1.bf16.msra.mxu0 0
  %62 = vmatprep.subr.bf16.mxu0 0
  %63 = vmatpush1.bf16.msra.mxu0 0
  %64 = vmatprep.subr.bf16.mxu0 0
  %65 = vmatpush1.bf16.msra.mxu0 0
  %66 = vmatprep.subr.bf16.mxu0 0
  %67 = vmatpush1.bf16.msra.mxu0 0
  %68 = vmatprep.subr.bf16.mxu0 0
  %69 = vmatpush1.bf16.msra.mxu0 0
  %70 = vmatprep.subr.bf16.mxu0 0
  %71 = vmatpush1.bf16.msra.mxu0 0
  %72 = vmatprep.subr.bf16.mxu0 0
  %73 = vmatpush1.bf16.msra.mxu0 0
  %74 = vmatprep.subr.bf16.mxu0 0
  %75 = vmatpush1.bf16.msra.mxu0 0
  %76 = vmatprep.subr.bf16.mxu0 0
  %77 = vmatpush1.bf16.msra.mxu0 0
  %78 = vmatprep.subr.bf16.mxu0 0
  %79 = vmatpush1.bf16.msra.mxu0 0
  %80 = vmatprep.subr.bf16.mxu0 0
  %81 = vmatpush1.bf16.msra.mxu0 0
  %82 = vmatprep.subr.bf16.mxu0 0
  %83 = vmatpush1.bf16.msra.mxu0 0
  %84 = vmatprep.subr.bf16.mxu0 0
  %85 = vmatpush1.bf16.msra.mxu0 0
  %86 = vmatprep.mubr.bf16.mxu0 0
  %87 = vmatmul.mubr.bf16.gmra.mrb[0].mxu0 %v52
  %v88 = vpop.f32.mrb[0].mxu0
  %v89 = vadd.f32 0.0, %v88
  %v90 = vpop.f32.mrb[0].mxu0
  %v91 = vpop.f32.mrb[0].mxu0
  %v92 = vadd.f32 0.0, %v91
  %v93 = vpop.f32.mrb[0].mxu0
  %94 = vdwg.mxu0
  %v95 = vadd.f32 %v27, %v89
  %v96 = vadd.f32 %v28, %v92
  %97 = vst.msk [vmem:[#allocation2] sm:$0xff] %vm50, %v95
  %98 = vst.msk [vmem:[#allocation2 + $0x8] sm:$0xff] %vm50, %v96
  // Predicated region
  $region22: #{vit_forward.15} parent=0 // pred_check
    %p99 = pneg %p18
  $region23: #{vit_forward.15} parent=0 // pred_check_branch
    %101 = sbr.rel (%p99) target = $region25
  $region24: #{vit_forward.15} parent=0 // pred_region
    %v102 = vld [vmem:[#allocation2] sm:$0xff]
    %v103 = vld [vmem:[#allocation2 + $0x8] sm:$0xff]
    %v104 = vld [vmem:[%s2] sm:$0x1]
    %v106 = vlaneseq
    %v107 = vshrl.u32 %v106, 7
    %v108 = vsub.s32 0, %v107
    %v109 = vrot.slane %v104, %v108
    %v111 = vadd.f32 %v102, %v109
    %v112 = vadd.f32 %v103, %v109
    %v113 = vld [vmem:[%s3] sm:$0xff]
    %v114 = vld [vmem:[%s3 + $0x8] sm:$0xff]
    %v115 = vadd.f32 %v111, %v113
    %v116 = vadd.f32 %v112, %v114
    %117 = vst.msk [vmem:[%s4] sm:$0xff] %vm50, %v115
    %118 = vst.msk [vmem:[%s4 + $0x8] sm:$0xff] %vm50, %v116
  $region25: #{vit_forward.15} parent=0 // pred_fallthru
    _
  // Predicated region
  $region26: #{vit_forward.15} parent=0 // pred_check
    _
  $region27: #{vit_forward.15} parent=0 // pred_check_branch
    %120 = sbr.rel (0) target = $region29
  $region28: #{vit_forward.15} parent=0 // pred_region
    _
  $region29: #{vit_forward.15} parent=0 // pred_fallthru
    _
  // Predicated region
  $region30: #{vit_forward.15} parent=0 // pred_check
    _
  $region31: #{vit_forward.15} parent=0 // pred_check_branch
    %122 = sbr.rel (0) target = $region33
  $region32: #{vit_forward.15} parent=0 // pred_region
    _
  $region33: #{vit_forward.15} parent=0 // pred_fallthru
    _

// kernel: vit_forward.17
$region0: #{vit_forward.17}
  #allocation0 [shape = 'u32[]', space=smem, size = 0x4, offset = 0x4, fixed_abs, tag = 'smem constant byte address 0x4 - core index']
  #allocation1 [shape = 'u32[144,128]{1,0:T(1,128)}', space=vmem, size = 0x12000, scoped, tag = 'internal scratch']
  #allocation2 [shape = 'f32[16,32]{1,0:T(8,128)}', space=vmem, size = 0x2000, scoped, tag = 'scratch operand']
  %s0 = inlined_call_operand.vmem [shape: bf16[16,64], index: 0, kind: input, shape index: {}]
  %s1 = inlined_call_operand.vmem [shape: bf16[64,32], index: 1, kind: input, shape index: {}]
  %s2 = inlined_call_operand.vmem [shape: f32[1,32], index: 2, kind: input, shape index: {}]
  %s3 = inlined_call_operand.vmem [shape: f32[16,32], index: 3, kind: input, shape index: {}]
  %s4 = inlined_call_operand.vmem [shape: f32[16,32], index: 4, kind: output, shape index: {}]
  %s5 = sld [smem:[#allocation0]]
  $region34: #{vit_forward.17} parent=0
    _
  %s7 = ssub.s32 1, %s5
  %s8 = scalar_select 0, %s7, %s5
  // Predicated region
  $region2: #{vit_forward.17} parent=0 // pred_check
    _
  $region3: #{vit_forward.17} parent=0 // pred_check_branch
    %10 = sbr.rel (0) target = $region5
  $region4: #{vit_forward.17} parent=0 // pred_region
    _
  $region5: #{vit_forward.17} parent=0 // pred_fallthru
    _
  // Predicated region
  $region6: #{vit_forward.17} parent=0 // pred_check
    _
  $region7: #{vit_forward.17} parent=0 // pred_check_branch
    %12 = sbr.rel (0) target = $region9
  $region8: #{vit_forward.17} parent=0 // pred_region
    _
  $region9: #{vit_forward.17} parent=0 // pred_fallthru
    _
  // Predicated region
  $region10: #{vit_forward.17} parent=0 // pred_check
    _
  $region11: #{vit_forward.17} parent=0 // pred_check_branch
    %14 = sbr.rel (0) target = $region13
  $region12: #{vit_forward.17} parent=0 // pred_region
    _
  $region13: #{vit_forward.17} parent=0 // pred_fallthru
    _
  // Predicated region
  $region14: #{vit_forward.17} parent=0 // pred_check
    _
  $region15: #{vit_forward.17} parent=0 // pred_check_branch
    %16 = sbr.rel (0) target = $region17
  $region16: #{vit_forward.17} parent=0 // pred_region
    _
  $region17: #{vit_forward.17} parent=0 // pred_fallthru
    _
  %p18 = scmp.eq.s32.totalorder 0, 0
  // Predicated region
  $region18: #{vit_forward.17} parent=0 // pred_check
    %p19 = pneg %p18
  $region19: #{vit_forward.17} parent=0 // pred_check_branch
    %21 = sbr.rel (%p19) target = $region21
  $region20: #{vit_forward.17} parent=0 // pred_region
    %vm22 = vcmask 261120
    %23 = vst.msk [vmem:[#allocation2] sm:$0xff] %vm22, 0.0
    %24 = vst.msk [vmem:[#allocation2 + $0x8] sm:$0xff] %vm22, 0.0
  $region21: #{vit_forward.17} parent=0 // pred_fallthru
    _
  %v25 = vld [vmem:[%s0] sm:$0xf]
  %v26 = vld [vmem:[%s0 + $0x4] sm:$0xf]
  %v27 = vld [vmem:[#allocation2] sm:$0xff]
  %v28 = vld [vmem:[#allocation2 + $0x8] sm:$0xff]
  %v29 = vld [vmem:[%s1] sm:$0xf]
  %v30 = vld [vmem:[%s1 + $0x4] sm:$0xf]
  %v31 = vld [vmem:[%s1 + $0x8] sm:$0xf]
  %v32 = vld [vmem:[%s1 + $0xc] sm:$0xf]
  %v33 = vld [vmem:[%s1 + $0x10] sm:$0xf]
  %v34 = vld [vmem:[%s1 + $0x14] sm:$0xf]
  %v35 = vld [vmem:[%s1 + $0x18] sm:$0xf]
  %v36 = vld [vmem:[%s1 + $0x1c] sm:$0xf]
  %v39 = vunpack.c.l.b16 %v25
  %v40 = vunpack.c.l.b16 %v26
  %v41 = vpack.c.b16 %v40, %v39
  %v50 = vunpack.c.l.b16 %v29
  %v51 = vunpack.c.l.b16 %v30
  %v52 = vunpack.c.l.b16 %v31
  %v53 = vunpack.c.l.b16 %v32
  %v54 = vunpack.c.l.b16 %v33
  %v55 = vunpack.c.l.b16 %v34
  %v56 = vunpack.c.l.b16 %v35
  %v57 = vunpack.c.l.b16 %v36
  %v58 = vpack.c.b16 %v51, %v50
  %v59 = vpack.c.b16 %v53, %v52
  %v60 = vpack.c.b16 %v55, %v54
  %v61 = vpack.c.b16 %v57, %v56
  %vm66 = vcmask 523264
  %v68 = vsel %vm66, %v41, 0
  %70 = vmatprep.subr.bf16.mxu0 0
  %71 = vmatpush1.bf16.msra.mxu0 %v58
  %72 = vmatprep.subr.bf16.mxu0 0
  %73 = vmatpush1.bf16.msra.mxu0 %v59
  %74 = vmatprep.subr.bf16.mxu0 0
  %75 = vmatpush1.bf16.msra.mxu0 %v60
  %76 = vmatprep.subr.bf16.mxu0 0
  %77 = vmatpush1.bf16.msra.mxu0 %v61
  %78 = vmatprep.subr.bf16.mxu0 0
  %79 = vmatpush1.bf16.msra.mxu0 0
  %80 = vmatprep.subr.bf16.mxu0 0
  %81 = vmatpush1.bf16.msra.mxu0 0
  %82 = vmatprep.subr.bf16.mxu0 0
  %83 = vmatpush1.bf16.msra.mxu0 0
  %84 = vmatprep.subr.bf16.mxu0 0
  %85 = vmatpush1.bf16.msra.mxu0 0
  %86 = vmatprep.subr.bf16.mxu0 0
  %87 = vmatpush1.bf16.msra.mxu0 0
  %88 = vmatprep.subr.bf16.mxu0 0
  %89 = vmatpush1.bf16.msra.mxu0 0
  %90 = vmatprep.subr.bf16.mxu0 0
  %91 = vmatpush1.bf16.msra.mxu0 0
  %92 = vmatprep.subr.bf16.mxu0 0
  %93 = vmatpush1.bf16.msra.mxu0 0
  %94 = vmatprep.subr.bf16.mxu0 0
  %95 = vmatpush1.bf16.msra.mxu0 0
  %96 = vmatprep.subr.bf16.mxu0 0
  %97 = vmatpush1.bf16.msra.mxu0 0
  %98 = vmatprep.subr.bf16.mxu0 0
  %99 = vmatpush1.bf16.msra.mxu0 0
  %100 = vmatprep.subr.bf16.mxu0 0
  %101 = vmatpush1.bf16.msra.mxu0 0
  %102 = vmatprep.mubr.bf16.mxu0 0
  %103 = vmatmul.mubr.bf16.gmra.mrb[0].mxu0 %v68
  %v104 = vpop.f32.mrb[0].mxu0
  %v105 = vadd.f32 0.0, %v104
  %v106 = vpop.f32.mrb[0].mxu0
  %v107 = vpop.f32.mrb[0].mxu0
  %v108 = vadd.f32 0.0, %v107
  %v109 = vpop.f32.mrb[0].mxu0
  %110 = vdwg.mxu0
  %v111 = vadd.f32 %v27, %v105
  %v112 = vadd.f32 %v28, %v108
  %vm113 = vcmask 261120
  %114 = vst.msk [vmem:[#allocation2] sm:$0xff] %vm113, %v111
  %115 = vst.msk [vmem:[#allocation2 + $0x8] sm:$0xff] %vm113, %v112
  // Predicated region
  $region22: #{vit_forward.17} parent=0 // pred_check
    %p116 = pneg %p18
  $region23: #{vit_forward.17} parent=0 // pred_check_branch
    %118 = sbr.rel (%p116) target = $region25
  $region24: #{vit_forward.17} parent=0 // pred_region
    %v119 = vld [vmem:[#allocation2] sm:$0xff]
    %v120 = vld [vmem:[#allocation2 + $0x8] sm:$0xff]
    %v121 = vld [vmem:[%s2] sm:$0x1]
    %v123 = vlaneseq
    %v124 = vshrl.u32 %v123, 7
    %v125 = vsub.s32 0, %v124
    %v126 = vrot.slane %v121, %v125
    %v128 = vadd.f32 %v119, %v126
    %v129 = vadd.f32 %v120, %v126
    %v130 = vld [vmem:[%s3] sm:$0xff]
    %v131 = vld [vmem:[%s3 + $0x8] sm:$0xff]
    %v132 = vadd.f32 %v128, %v130
    %v133 = vadd.f32 %v129, %v131
    %134 = vst.msk [vmem:[%s4] sm:$0xff] %vm113, %v132
    %135 = vst.msk [vmem:[%s4 + $0x8] sm:$0xff] %vm113, %v133
  $region25: #{vit_forward.17} parent=0 // pred_fallthru
    _
  // Predicated region
  $region26: #{vit_forward.17} parent=0 // pred_check
    _
  $region27: #{vit_forward.17} parent=0 // pred_check_branch
    %137 = sbr.rel (0) target = $region29
  $region28: #{vit_forward.17} parent=0 // pred_region
    _
  $region29: #{vit_forward.17} parent=0 // pred_fallthru
    _
  // Predicated region
  $region30: #{vit_forward.17} parent=0 // pred_check
    _
  $region31: #{vit_forward.17} parent=0 // pred_check_branch
    %139 = sbr.rel (0) target = $region33
  $region32: #{vit_forward.17} parent=0 // pred_region
    _
  $region33: #{vit_forward.17} parent=0 // pred_fallthru
    _

// kernel: vit_forward.23
$region0: #{vit_forward.23}
  #allocation0 [shape = 'u32[]', space=smem, size = 0x4, offset = 0x4, fixed_abs, tag = 'smem constant byte address 0x4 - core index']
  #allocation1 [shape = 'u32[144,128]{1,0:T(1,128)}', space=vmem, size = 0x12000, scoped, tag = 'internal scratch']
  %s0 = inlined_call_operand.vmem [shape: f32[16,32], index: 0, kind: input, shape index: {}]
  %s1 = inlined_call_operand.vmem [shape: f32[1,32], index: 1, kind: input, shape index: {}]
  %s2 = inlined_call_operand.vmem [shape: f32[1,32], index: 2, kind: input, shape index: {}]
  %s3 = inlined_call_operand.vmem [shape: f32[16,32], index: 3, kind: output, shape index: {}]
  %s4 = sld [smem:[#allocation0]]
  $region22: #{vit_forward.23} parent=0
    _
  %s6 = ssub.s32 1, %s4
  %s7 = scalar_select 0, %s6, %s4
  // Predicated region
  $region2: #{vit_forward.23} parent=0 // pred_check
    _
  $region3: #{vit_forward.23} parent=0 // pred_check_branch
    %9 = sbr.rel (0) target = $region5
  $region4: #{vit_forward.23} parent=0 // pred_region
    _
  $region5: #{vit_forward.23} parent=0 // pred_fallthru
    _
  // Predicated region
  $region6: #{vit_forward.23} parent=0 // pred_check
    _
  $region7: #{vit_forward.23} parent=0 // pred_check_branch
    %11 = sbr.rel (0) target = $region9
  $region8: #{vit_forward.23} parent=0 // pred_region
    _
  $region9: #{vit_forward.23} parent=0 // pred_fallthru
    _
  // Predicated region
  $region10: #{vit_forward.23} parent=0 // pred_check
    _
  $region11: #{vit_forward.23} parent=0 // pred_check_branch
    %13 = sbr.rel (0) target = $region13
  $region12: #{vit_forward.23} parent=0 // pred_region
    _
  $region13: #{vit_forward.23} parent=0 // pred_fallthru
    _
  %v14 = vld [vmem:[%s0] sm:$0xff]
  %v15 = vld [vmem:[%s0 + $0x8] sm:$0xff]
  %vm16 = vcmask 261120
  %v17 = vsel %vm16, %v14, 0.0
  %18 = vadd.xlane.f32.xlu0 %v17
  %v19 = vpop.xlane.xlu0 %18
  %v20 = vsel %vm16, %v15, 0.0
  %21 = vadd.xlane.f32.xlu0 %v20
  %v22 = vpop.xlane.xlu0 %21
  %v23 = vrcp.pop 32.0
  %v24 = vmul.f32 %v19, %v23
  %v25 = vmul.f32 %v22, %v23
  %v26 = vsub.f32 %v14, %v24
  %v27 = vsub.f32 %v15, %v25
  %v28 = vmul.f32 %v26, %v26
  %v29 = vmul.f32 %v27, %v27
  %v30 = vsel %vm16, %v28, 0.0
  %31 = vadd.xlane.f32.xlu0 %v30
  %v32 = vpop.xlane.xlu0 %31
  %v33 = vsel %vm16, %v29, 0.0
  %34 = vadd.xlane.f32.xlu0 %v33
  %v35 = vpop.xlane.xlu0 %34
  %v36 = vmul.f32 %v32, %v23
  %v37 = vmul.f32 %v35, %v23
  %v38 = vadd.f32 %v36, 1e-12
  %v39 = vadd.f32 %v37, 1e-12
  %v40 = vrsqrt.pop %v38
  %v41 = vrsqrt.pop %v39
  %v42 = vmul.f32 %v26, %v40
  %v43 = vmul.f32 %v27, %v41
  %v44 = vld [vmem:[%s1] sm:$0x1]
  %v46 = vlaneseq
  %v47 = vshrl.u32 %v46, 7
  %v48 = vsub.s32 0, %v47
  %v49 = vrot.slane %v44, %v48
  %v51 = vmul.f32 %v42, %v49
  %v52 = vmul.f32 %v43, %v49
  %v53 = vld [vmem:[%s2] sm:$0x1]
  %v55 = vlaneseq
  %v56 = vshrl.u32 %v55, 7
  %v57 = vsub.s32 0, %v56
  %v58 = vrot.slane %v53, %v57
  %v60 = vadd.f32 %v51, %v58
  %v61 = vadd.f32 %v52, %v58
  %62 = vst.msk [vmem:[%s3] sm:$0xff] %vm16, %v60
  %63 = vst.msk [vmem:[%s3 + $0x8] sm:$0xff] %vm16, %v61
  // Predicated region
  $region14: #{vit_forward.23} parent=0 // pred_check
    _
  $region15: #{vit_forward.23} parent=0 // pred_check_branch
    %65 = sbr.rel (0) target = $region17
  $region16: #{vit_forward.23} parent=0 // pred_region
    _
  $region17: #{vit_forward.23} parent=0 // pred_fallthru
    _
  // Predicated region
  $region18: #{vit_forward.23} parent=0 // pred_check
    _
  $region19: #{vit_forward.23} parent=0 // pred_check_branch
    %67 = sbr.rel (0) target = $region21
  $region20: #{vit_forward.23} parent=0 // pred_region
    _
  $region21: #{vit_forward.23} parent=0 // pred_fallthru
    _

// kernel: vit_forward.16
$region0: #{vit_forward.16}
  #allocation0 [shape = 'u32[]', space=smem, size = 0x4, offset = 0x4, fixed_abs, tag = 'smem constant byte address 0x4 - core index']
  #allocation1 [shape = 'u32[144,128]{1,0:T(1,128)}', space=vmem, size = 0x12000, scoped, tag = 'internal scratch']
  #allocation2 [shape = 'f32[16,64]{1,0:T(8,128)}', space=vmem, size = 0x2000, scoped, tag = 'scratch operand']
  #allocation3 [shape = 'bf16[16,32]{1,0:T(16,128)(2,1)}', space=vmem, size = 0x1000, scoped, tag = 'scratch operand']
  %s0 = inlined_call_operand.vmem [shape: f32[16,32], index: 0, kind: input, shape index: {}]
  %s1 = inlined_call_operand.vmem [shape: bf16[32,64], index: 1, kind: input, shape index: {}]
  %s2 = inlined_call_operand.vmem [shape: f32[1,64], index: 2, kind: input, shape index: {}]
  %s3 = inlined_call_operand.vmem [shape: f32[1,32], index: 3, kind: input, shape index: {}]
  %s4 = inlined_call_operand.vmem [shape: f32[1,32], index: 4, kind: input, shape index: {}]
  %s5 = inlined_call_operand.vmem [shape: bf16[16,64], index: 5, kind: output, shape index: {}]
  %s6 = sld [smem:[#allocation0]]
  $region42: #{vit_forward.16} parent=0
    _
  %s8 = ssub.s32 1, %s6
  %s9 = scalar_select 0, %s8, %s6
  // Predicated region
  $region2: #{vit_forward.16} parent=0 // pred_check
    _
  $region3: #{vit_forward.16} parent=0 // pred_check_branch
    %11 = sbr.rel (0) target = $region5
  $region4: #{vit_forward.16} parent=0 // pred_region
    _
  $region5: #{vit_forward.16} parent=0 // pred_fallthru
    _
  // Predicated region
  $region6: #{vit_forward.16} parent=0 // pred_check
    _
  $region7: #{vit_forward.16} parent=0 // pred_check_branch
    %13 = sbr.rel (0) target = $region9
  $region8: #{vit_forward.16} parent=0 // pred_region
    _
  $region9: #{vit_forward.16} parent=0 // pred_fallthru
    _
  // Predicated region
  $region10: #{vit_forward.16} parent=0 // pred_check
    _
  $region11: #{vit_forward.16} parent=0 // pred_check_branch
    %15 = sbr.rel (0) target = $region13
  $region12: #{vit_forward.16} parent=0 // pred_region
    _
  $region13: #{vit_forward.16} parent=0 // pred_fallthru
    _
  // Predicated region
  $region14: #{vit_forward.16} parent=0 // pred_check
    _
  $region15: #{vit_forward.16} parent=0 // pred_check_branch
    %17 = sbr.rel (0) target = $region17
  $region16: #{vit_forward.16} parent=0 // pred_region
    _
  $region17: #{vit_forward.16} parent=0 // pred_fallthru
    _
  // Predicated region
  $region18: #{vit_forward.16} parent=0 // pred_check
    _
  $region19: #{vit_forward.16} parent=0 // pred_check_branch
    %19 = sbr.rel (0) target = $region21
  $region20: #{vit_forward.16} parent=0 // pred_region
    _
  $region21: #{vit_forward.16} parent=0 // pred_fallthru
    _
  %p21 = scmp.eq.s32.totalorder 0, 0
  // Predicated region
  $region22: #{vit_forward.16} parent=0 // pred_check
    %p22 = pneg %p21
  $region23: #{vit_forward.16} parent=0 // pred_check_branch
    %24 = sbr.rel (%p22) target = $region25
  $region24: #{vit_forward.16} parent=0 // pred_region
    %vm25 = vcmask 523264
    %26 = vst.msk [vmem:[#allocation2] sm:$0xff] %vm25, 0.0
    %27 = vst.msk [vmem:[#allocation2 + $0x8] sm:$0xff] %vm25, 0.0
  $region25: #{vit_forward.16} parent=0 // pred_fallthru
    _
  %p28 = scmp.eq.s32.totalorder 0, 0
  // Predicated region
  $region26: #{vit_forward.16} parent=0 // pred_check
    %p29 = pneg %p28
  $region27: #{vit_forward.16} parent=0 // pred_check_branch
    %31 = sbr.rel (%p29) target = $region29
  $region28: #{vit_forward.16} parent=0 // pred_region
    %v32 = vld [vmem:[%s0] sm:$0xff]
    %v33 = vld [vmem:[%s0 + $0x8] sm:$0xff]
    %vm34 = vcmask 261120
    %v35 = vsel %vm34, %v32, 0.0
    %36 = vadd.xlane.f32.xlu0 %v35
    %v37 = vpop.xlane.xlu0 %36
    %v38 = vsel %vm34, %v33, 0.0
    %39 = vadd.xlane.f32.xlu0 %v38
    %v40 = vpop.xlane.xlu0 %39
    %v41 = vrcp.pop 32.0
    %v42 = vmul.f32 %v37, %v41
    %v43 = vmul.f32 %v40, %v41
    %v44 = vsub.f32 %v32, %v42
    %v45 = vsub.f32 %v33, %v43
    %v46 = vmul.f32 %v44, %v44
    %v47 = vmul.f32 %v45, %v45
    %v48 = vsel %vm34, %v46, 0.0
    %49 = vadd.xlane.f32.xlu0 %v48
    %v50 = vpop.xlane.xlu0 %49
    %v51 = vsel %vm34, %v47, 0.0
    %52 = vadd.xlane.f32.xlu0 %v51
    %v53 = vpop.xlane.xlu0 %52
    %v54 = vmul.f32 %v50, %v41
    %v55 = vmul.f32 %v53, %v41
    %v56 = vadd.f32 %v54, 1e-12
    %v57 = vadd.f32 %v55, 1e-12
    %v58 = vrsqrt.pop %v56
    %v59 = vrsqrt.pop %v57
    %v60 = vmul.f32 %v44, %v58
    %v61 = vmul.f32 %v45, %v59
    %v62 = vld [vmem:[%s3] sm:$0x1]
    %v64 = vlaneseq
    %v65 = vshrl.u32 %v64, 7
    %v66 = vsub.s32 0, %v65
    %v67 = vrot.slane %v62, %v66
    %v69 = vmul.f32 %v60, %v67
    %v70 = vmul.f32 %v61, %v67
    %v71 = vld [vmem:[%s4] sm:$0x1]
    %v73 = vlaneseq
    %v74 = vshrl.u32 %v73, 7
    %v75 = vsub.s32 0, %v74
    %v76 = vrot.slane %v71, %v75
    %v78 = vadd.f32 %v69, %v76
    %v79 = vadd.f32 %v70, %v76
    %v80 = vpack.c.bf16 %v79, %v78
    %81 = vst.msk [vmem:[#allocation3] sm:$0xff] %vm34, %v80
  $region29: #{vit_forward.16} parent=0 // pred_fallthru
    _
  %v82 = vld [vmem:[#allocation3] sm:$0xff]
  %v83 = vld [vmem:[#allocation2] sm:$0xff]
  %v84 = vld [vmem:[#allocation2 + $0x8] sm:$0xff]
  %v85 = vld [vmem:[%s1] sm:$0xf]
  %v86 = vld [vmem:[%s1 + $0x4] sm:$0xf]
  %v87 = vld [vmem:[%s1 + $0x8] sm:$0xf]
  %v88 = vld [vmem:[%s1 + $0xc] sm:$0xf]
  %v93 = vunpack.c.l.b16 %v85
  %v94 = vunpack.c.l.b16 %v86
  %v95 = vunpack.c.l.b16 %v87
  %v96 = vunpack.c.l.b16 %v88
  %v97 = vpack.c.b16 %v94, %v93
  %v98 = vpack.c.b16 %v96, %v95
  %vm101 = vcmask 261120
  %v103 = vsel %vm101, %v82, 0
  %105 = vmatprep.subr.bf16.mxu0 0
  %106 = vmatpush1.bf16.msra.mxu0 %v97
  %107 = vmatprep.subr.bf16.mxu0 0
  %108 = vmatpush1.bf16.msra.mxu0 %v98
  %109 = vmatprep.subr.bf16.mxu0 0
  %110 = vmatpush1.bf16.msra.mxu0 0
  %111 = vmatprep.subr.bf16.mxu0 0
  %112 = vmatpush1.bf16.msra.mxu0 0
  %113 = vmatprep.subr.bf16.mxu0 0
  %114 = vmatpush1.bf16.msra.mxu0 0
  %115 = vmatprep.subr.bf16.mxu0 0
  %116 = vmatpush1.bf16.msra.mxu0 0
  %117 = vmatprep.subr.bf16.mxu0 0
  %118 = vmatpush1.bf16.msra.mxu0 0
  %119 = vmatprep.subr.bf16.mxu0 0
  %120 = vmatpush1.bf16.msra.mxu0 0
  %121 = vmatprep.subr.bf16.mxu0 0
  %122 = vmatpush1.bf16.msra.mxu0 0
  %123 = vmatprep.subr.bf16.mxu0 0
  %124 = vmatpush1.bf16.msra.mxu0 0
  %125 = vmatprep.subr.bf16.mxu0 0
  %126 = vmatpush1.bf16.msra.mxu0 0
  %127 = vmatprep.subr.bf16.mxu0 0
  %128 = vmatpush1.bf16.msra.mxu0 0
  %129 = vmatprep.subr.bf16.mxu0 0
  %130 = vmatpush1.bf16.msra.mxu0 0
  %131 = vmatprep.subr.bf16.mxu0 0
  %132 = vmatpush1.bf16.msra.mxu0 0
  %133 = vmatprep.subr.bf16.mxu0 0
  %134 = vmatpush1.bf16.msra.mxu0 0
  %135 = vmatprep.subr.bf16.mxu0 0
  %136 = vmatpush1.bf16.msra.mxu0 0
  %137 = vmatprep.mubr.bf16.mxu0 0
  %138 = vmatmul.mubr.bf16.gmra.mrb[0].mxu0 %v103
  %v139 = vpop.f32.mrb[0].mxu0
  %v140 = vadd.f32 0.0, %v139
  %v141 = vpop.f32.mrb[0].mxu0
  %v142 = vpop.f32.mrb[0].mxu0
  %v143 = vadd.f32 0.0, %v142
  %v144 = vpop.f32.mrb[0].mxu0
  %145 = vdwg.mxu0
  %v146 = vadd.f32 %v83, %v140
  %v147 = vadd.f32 %v84, %v143
  %vm148 = vcmask 523264
  %149 = vst.msk [vmem:[#allocation2] sm:$0xff] %vm148, %v146
  %150 = vst.msk [vmem:[#allocation2 + $0x8] sm:$0xff] %vm148, %v147
  // Predicated region
  $region30: #{vit_forward.16} parent=0 // pred_check
    %p151 = pneg %p21
  $region31: #{vit_forward.16} parent=0 // pred_check_branch
    %153 = sbr.rel (%p151) target = $region33
  $region32: #{vit_forward.16} parent=0 // pred_region
    %v154 = vld [vmem:[#allocation2] sm:$0xff]
    %v155 = vld [vmem:[#allocation2 + $0x8] sm:$0xff]
    %v156 = vld [vmem:[%s2] sm:$0x1]
    %v158 = vlaneseq
    %v159 = vshrl.u32 %v158, 7
    %v160 = vsub.s32 0, %v159
    %v161 = vrot.slane %v156, %v160
    %v163 = vadd.f32 %v154, %v161
    %v164 = vadd.f32 %v155, %v161
    %v165 = vmul.f32 %v163, 0.5
    %v166 = vmul.f32 %v164, 0.5
    %v167 = vmul.f32 %v163, 0.70710677
    %v168 = vmul.f32 %v164, 0.70710677
    %v169 = verf.f32.pop %v167
    %v170 = verf.f32.pop %v168
    %v171 = vadd.f32 %v169, 1.0
    %v172 = vadd.f32 %v170, 1.0
    %v173 = vmul.f32 %v165, %v171
    %v174 = vmul.f32 %v166, %v172
    %v175 = vpack.c.bf16 %v174, %v173
    %v177 = vunpack.c.l.b16 %v175
    %v178 = vunpack.c.h.b16 %v175
    %v179 = vpack.c.b16 %v177, %v177
    %v180 = vpack.c.b16 %v178, %v178
    %vm183 = vcmask 519168
    %184 = vst.msk [vmem:[%s5] sm:$0xf] %vm183, %v179
    %185 = vst.msk [vmem:[%s5 + $0x4] sm:$0xf] %vm183, %v180
  $region33: #{vit_forward.16} parent=0 // pred_fallthru
    _
  // Predicated region
  $region34: #{vit_forward.16} parent=0 // pred_check
    _
  $region35: #{vit_forward.16} parent=0 // pred_check_branch
    %187 = sbr.rel (0) target = $region37
  $region36: #{vit_forward.16} parent=0 // pred_region
    _
  $region37: #{vit_forward.16} parent=0 // pred_fallthru
    _
  // Predicated region
  $region38: #{vit_forward.16} parent=0 // pred_check
    _
  $region39: #{vit_forward.16} parent=0 // pred_check_branch
    %189 = sbr.rel (0) target = $region41
  $region40: #{vit_forward.16} parent=0 // pred_region
    _
  $region41: #{vit_forward.16} parent=0 // pred_fallthru
    _

</llo_original>
